<compile_context>
chip_gen: v6e
topology: v6e:2x2x1
jax: 0.10.0
libtpu: 0.0.40
codegen_flags: <defaults>
</compile_context>

<pallas_src>
import functools
import math

import jax
import jax.numpy as jnp
from jax import lax
from jax.experimental import pallas as pl
from jax.experimental.pallas import tpu as pltpu


NEG_INF = -1e30


def _round_up(x, m):
    return (x + m - 1) // m * m


def _slab_offsets(num_features, hidden, num_layers):
    """Static row offsets of each parameter inside the packed slab."""
    r_w0 = 0
    r_b0 = r_w0 + _round_up(num_features, 8)
    r_wc = r_b0 + 8
    r_bc = r_wc + num_layers * hidden
    r_w1 = r_bc + _round_up(max(num_layers, 1), 8)
    r_b1 = r_w1 + hidden
    rows = r_b1 + 8
    return r_w0, r_b0, r_wc, r_bc, r_w1, r_b1, rows


# --------------------------------------------------------------------------
# Fused forward kernel: lin0+relu, L x (TransformerConv+relu), lin1+log_softmax
# --------------------------------------------------------------------------
def _fused_forward_kernel(x_ref, bias_ref, slab_ref, o_ref, *,
                          num_layers, num_features, hidden, lanes):
    H = hidden
    r_w0, r_b0, r_wc, r_bc, r_w1, r_b1, _ = _slab_offsets(
        num_features, hidden, num_layers)
    bf16 = jnp.bfloat16

    # --- lin0 + relu -------------------------------------------------------
    w0 = slab_ref[r_w0:r_w0 + num_features, :][:, :H]          # [F, H]
    b0 = slab_ref[r_b0:r_b0 + 8, :][:1, :H]                    # [1, H]
    h = jnp.dot(x_ref[...].astype(bf16), w0.astype(bf16),
                preferred_element_type=jnp.float32)
    h = jnp.maximum(h + b0, 0.0)

    # --- adjacency: additive bias (0 where edge j->i, -1e30 otherwise) ------
    bias = bias_ref[...]                                        # [TM, TM] f32
    # per-row "has any incoming edge" guard, derived once from the bias block
    has_edge = (jnp.max(bias, axis=-1, keepdims=True) > -0.5).astype(jnp.float32)

    # conv biases, loaded once (layer l = row l of this 8-row aligned block)
    n_bc = _round_up(max(num_layers, 1), 8)
    bqkvs = slab_ref[r_bc:r_bc + n_bc, :]                       # [n_bc, 4H]

    # --- TransformerConv stack (relu fused) ---------------------------------
    for l in range(num_layers):
        w_pack = slab_ref[r_wc + l * H: r_wc + (l + 1) * H, :]  # [H, 4H]
        b_pack = bqkvs[l:l + 1, :]                               # [1, 4H]
        proj = jnp.dot(h.astype(bf16), w_pack.astype(bf16),
                       preferred_element_type=jnp.float32) + b_pack
        # NOTE: 32-lane value slices of the [TM,128] projection; bundle dump
        # showed no relayout copies, so the single packed matmul stays.
        q = proj[:, 0 * H:1 * H]          # already scaled by 1/sqrt(H)
        k = proj[:, 1 * H:2 * H]
        v = proj[:, 2 * H:3 * H]
        skip = proj[:, 3 * H:4 * H]

        # scores[i, j] = q_i . k_j  (contract feature axes; no k.T transpose)
        scores = lax.dot_general(q.astype(bf16), k.astype(bf16),
                                 (((1,), (1,)), ((), ())),
                                 preferred_element_type=jnp.float32)
        masked = scores + bias
        row_max = jnp.max(masked, axis=-1, keepdims=True)
        p = jnp.exp(masked - row_max)            # masked entries underflow to 0
        denom = jnp.sum(p, axis=-1, keepdims=True)
        # has_edge folded into the reciprocal: isolated nodes stay exactly 0
        # (skip-only output), matching PyG's softmax over an empty neighbor set.
        inv_guard = pl.reciprocal(denom, approx=True) * has_edge

        attn = jnp.dot(p.astype(bf16), v.astype(bf16),
                       preferred_element_type=jnp.float32)
        h = jnp.maximum(attn * inv_guard + skip, 0.0)

    # --- lin1 (lane-padded to `lanes` classes) + log_softmax ----------------
    w1 = slab_ref[r_w1:r_w1 + H, :]                             # [H, lanes]
    b1 = slab_ref[r_b1:r_b1 + 8, :][:1, :]                      # [1, lanes]
    y = jnp.dot(h.astype(bf16), w1.astype(bf16),
                preferred_element_type=jnp.float32) + b1        # pads -> -1e30
    m = jnp.max(y, axis=-1, keepdims=True)
    z = y - m
    lse = jnp.log(jnp.sum(jnp.exp(z), axis=-1, keepdims=True))
    o_ref[...] = z - lse


# --------------------------------------------------------------------------
# Wrapper: grid over 128-row blocks of whole graphs; params slab resident.
# --------------------------------------------------------------------------
def transformer_v2_forward(params, x, adj, *, nodes_per_graph=None,
                           block_rows=128):
    n, num_features = x.shape
    assert num_features == params["num_features"]
    hidden = params["hidden"]
    num_layers = params["num_layers"]
    num_classes = params["num_classes"]
    lanes = params["lanes"]
    slab = params["slab"]

    tm = block_rows if (n % block_rows == 0) else n
    assert n % tm == 0
    if nodes_per_graph is not None:
        assert tm % nodes_per_graph == 0, "graphs must not straddle row blocks"

    # adjacency -> additive bias; only the diagonal (tm,tm) blocks are DMA'd.
    bias = jnp.where(adj > 0, 0.0, NEG_INF).astype(jnp.float32)

    kern = functools.partial(_fused_forward_kernel,
                             num_layers=num_layers,
                             num_features=num_features,
                             hidden=hidden,
                             lanes=lanes)
    out_pad = pl.pallas_call(
        kern,
        out_shape=jax.ShapeDtypeStruct((n, lanes), jnp.float32),
        grid=(n // tm,),
        in_specs=[
            pl.BlockSpec((tm, num_features), lambda i: (i, 0)),   # x rows
            pl.BlockSpec((tm, tm), lambda i: (i, i)),             # diag bias
            pl.BlockSpec(slab.shape, lambda i: (0, 0)),           # param slab
        ],
        out_specs=pl.BlockSpec((tm, lanes), lambda i: (i, 0)),
        compiler_params=pltpu.CompilerParams(
            dimension_semantics=("parallel",)),
    )(x, bias, slab)
    return out_pad[:, :num_classes]


# --------------------------------------------------------------------------
# Parameters: packed into one lane-dense [rows, 128] f32 slab.
# --------------------------------------------------------------------------
def init_params(key, num_features, hidden, num_classes, num_layers):
    assert hidden % 8 == 0
    lanes = max(4 * hidden, 128)
    assert num_classes <= lanes

    def lin(k, fin, fout):
        kw, kb = jax.random.split(k)
        bound = 1.0 / math.sqrt(fin)
        w = jax.random.uniform(kw, (fin, fout), jnp.float32, -bound, bound)
        b = jax.random.uniform(kb, (1, fout), jnp.float32, -bound, bound)
        return w, b

    keys = jax.random.split(key, 2 + 4 * num_layers)
    w0, b0 = lin(keys[0], num_features, hidden)
    w1, b1 = lin(keys[1], hidden, num_classes)

    scale = jnp.float32(1.0 / math.sqrt(hidden))   # folded into Wq / bq
    w_packs, b_packs = [], []
    for l in range(num_layers):
        kq, kk, kv, ks = keys[2 + 4 * l: 2 + 4 * (l + 1)]
        wq, bq = lin(kq, hidden, hidden)
        wk, bk = lin(kk, hidden, hidden)
        wv, bv = lin(kv, hidden, hidden)
        ws, bs = lin(ks, hidden, hidden)
        w_packs.append(jnp.concatenate([wq * scale, wk, wv, ws], axis=1))
        b_packs.append(jnp.concatenate([bq * scale, bk, bv, bs], axis=1))

    r_w0, r_b0, r_wc, r_bc, r_w1, r_b1, rows = _slab_offsets(
        num_features, hidden, num_layers)

    slab = jnp.zeros((rows, lanes), jnp.float32)
    slab = slab.at[r_w0:r_w0 + num_features, :hidden].set(w0)
    slab = slab.at[r_b0:r_b0 + 1, :hidden].set(b0)
    for l in range(num_layers):
        slab = slab.at[r_wc + l * hidden:r_wc + (l + 1) * hidden,
                       :4 * hidden].set(w_packs[l])
        slab = slab.at[r_bc + l:r_bc + l + 1, :4 * hidden].set(b_packs[l])
    slab = slab.at[r_w1:r_w1 + hidden, :num_classes].set(w1)
    # lane-padded lin1 bias: padded columns are -1e30 so exp() kills them in
    # the log-sum-exp and the real-class log-probs are exact.
    b1_row = jnp.full((1, lanes), NEG_INF, jnp.float32)
    b1_row = b1_row.at[:, :num_classes].set(b1)
    slab = slab.at[r_b1:r_b1 + 1, :].set(b1_row)

    return {"slab": slab, "hidden": hidden, "num_layers": num_layers,
            "num_features": num_features, "num_classes": num_classes,
            "lanes": lanes}


# --------------------------------------------------------------------------
# Main
# --------------------------------------------------------------------------
if __name__ == "__main__":
    NODES_PER_GRAPH = 8
    NUM_GRAPHS = 32            # 256 rows = 2 grid blocks of 128 (fills MXU M)
    NUM_FEATURES = 16
    HIDDEN = 32
    NUM_CLASSES = 5
    NUM_LAYERS = 2

    key = jax.random.PRNGKey(0)
    k_x, k_params = jax.random.split(key)

    n_total = NUM_GRAPHS * NODES_PER_GRAPH

    # data.x for the batched (disjoint-union) graph
    x = jax.random.normal(k_x, (n_total, NUM_FEATURES), jnp.float32)

    # per-graph edge_index: deterministic ring + self-loops (every node has at
    # least one incoming edge); the batch is the standard PyG disjoint union,
    # i.e. a block-diagonal dense adjacency adj[dst, src] = 1.
    src = jnp.concatenate([jnp.arange(NODES_PER_GRAPH), jnp.arange(NODES_PER_GRAPH)])
    dst = jnp.concatenate([(jnp.arange(NODES_PER_GRAPH) + 1) % NODES_PER_GRAPH,
                           jnp.arange(NODES_PER_GRAPH)])
    adj_single = jnp.zeros((NODES_PER_GRAPH, NODES_PER_GRAPH), jnp.float32)
    adj_single = adj_single.at[dst, src].set(1.0)
    adj = jnp.kron(jnp.eye(NUM_GRAPHS, dtype=jnp.float32), adj_single)

    params = init_params(k_params, NUM_FEATURES, HIDDEN, NUM_CLASSES, NUM_LAYERS)

    out = transformer_v2_forward(params, x, adj,
                                 nodes_per_graph=NODES_PER_GRAPH)
    out = jax.block_until_ready(out)

    assert out.shape == (n_total, NUM_CLASSES)
    # rows of a log_softmax must exponentiate-sum to 1
    assert bool(jnp.allclose(jnp.exp(out).sum(-1), 1.0, atol=1e-4))

    print("KERNEL_OK")
</pallas_src>

<mosaic_0001>
module attributes {stable_mosaic.version = 11 : i64} {
  func.func @_fused_forward_kernel(%arg0: i32, %arg1: memref<128x16xf32, #tpu.memory_space<vmem>>, %arg2: memref<128x128xf32, #tpu.memory_space<vmem>>, %arg3: memref<136x128xf32, #tpu.memory_space<vmem>>, %arg4: memref<128x128xf32, #tpu.memory_space<vmem>>) attributes {dimension_semantics = [#tpu.dimension_semantics<parallel>], iteration_bounds = array<i64: 2>, scalar_prefetch = 0 : i64, scratch_operands = 0 : i64, tpu.core_type = #tpu.core_type<tc>, window_params = [{transform_indices = @transform_0, window_bounds = array<i64: 128, 16>}, {transform_indices = @transform_1, window_bounds = array<i64: 128, 128>}, {pipeline_mode = #tpu.pipeline_mode<synchronous>, transform_indices = @transform_2, window_bounds = array<i64: 136, 128>}, {transform_indices = @transform_3, window_bounds = array<i64: 128, 128>}]} {
    %c0 = arith.constant 0 : index
    %c0_0 = arith.constant 0 : index
    %0 = vector.load %arg3[%c0, %c0_0] : memref<136x128xf32, #tpu.memory_space<vmem>>, vector<16x128xf32>
    %1 = vector.extract_strided_slice %0 {offsets = [0, 0], sizes = [16, 32], strides = [1, 1]} : vector<16x128xf32> to vector<16x32xf32>
    %c16 = arith.constant 16 : index
    %c0_1 = arith.constant 0 : index
    %2 = vector.load %arg3[%c16, %c0_1] : memref<136x128xf32, #tpu.memory_space<vmem>>, vector<8x128xf32>
    %3 = vector.extract_strided_slice %2 {offsets = [0, 0], sizes = [1, 32], strides = [1, 1]} : vector<8x128xf32> to vector<1x32xf32>
    %c0_2 = arith.constant 0 : index
    %c0_3 = arith.constant 0 : index
    %4 = vector.load %arg1[%c0_2, %c0_3] : memref<128x16xf32, #tpu.memory_space<vmem>>, vector<128x16xf32>
    %5 = arith.truncf %4 : vector<128x16xf32> to vector<128x16xbf16>
    %6 = arith.truncf %1 : vector<16x32xf32> to vector<16x32xbf16>
    %cst = arith.constant dense<0.000000e+00> : vector<128x32xf32>
    %7 = tpu.matmul %5, %6, %cst {dimension_numbers = #tpu.dot_dimension_numbers<[1], [0], [0], [1], [0, 0, 1, 1], [], []>} : vector<128x16xbf16>, vector<16x32xbf16>, vector<128x32xf32> -> vector<128x32xf32>
    %8 = vector.broadcast %3 : vector<1x32xf32> to vector<128x32xf32>
    %9 = arith.addf %7, %8 : vector<128x32xf32>
    %cst_4 = arith.constant 0.000000e+00 : f32
    %10 = vector.broadcast %cst_4 : f32 to vector<128x32xf32>
    %11 = arith.maximumf %9, %10 : vector<128x32xf32>
    %c0_5 = arith.constant 0 : index
    %c0_6 = arith.constant 0 : index
    %12 = vector.load %arg2[%c0_5, %c0_6] : memref<128x128xf32, #tpu.memory_space<vmem>>, vector<128x128xf32>
    %cst_7 = arith.constant dense<0xFF800000> : vector<128xf32>
    %13 = vector.multi_reduction <maximumf>, %12, %cst_7 [1] : vector<128x128xf32> to vector<128xf32>
    %14 = vector.shape_cast %13 : vector<128xf32> to vector<128x1xf32>
    %cst_8 = arith.constant -5.000000e-01 : f32
    %15 = vector.broadcast %cst_8 : f32 to vector<128x1xf32>
    %16 = arith.cmpf ogt, %14, %15 : vector<128x1xf32>
    %17 = arith.extui %16 : vector<128x1xi1> to vector<128x1xi32>
    %18 = arith.sitofp %17 : vector<128x1xi32> to vector<128x1xf32>
    %c88 = arith.constant 88 : index
    %c0_9 = arith.constant 0 : index
    %19 = vector.load %arg3[%c88, %c0_9] : memref<136x128xf32, #tpu.memory_space<vmem>>, vector<8x128xf32>
    %c24 = arith.constant 24 : index
    %c0_10 = arith.constant 0 : index
    %20 = vector.load %arg3[%c24, %c0_10] : memref<136x128xf32, #tpu.memory_space<vmem>>, vector<32x128xf32>
    %21 = vector.extract_strided_slice %19 {offsets = [0, 0], sizes = [1, 128], strides = [1, 1]} : vector<8x128xf32> to vector<1x128xf32>
    %22 = arith.truncf %11 : vector<128x32xf32> to vector<128x32xbf16>
    %23 = arith.truncf %20 : vector<32x128xf32> to vector<32x128xbf16>
    %cst_11 = arith.constant dense<0.000000e+00> : vector<128x128xf32>
    %24 = tpu.matmul %22, %23, %cst_11 {dimension_numbers = #tpu.dot_dimension_numbers<[1], [0], [0], [1], [0, 0, 1, 1], [], []>} : vector<128x32xbf16>, vector<32x128xbf16>, vector<128x128xf32> -> vector<128x128xf32>
    %25 = vector.broadcast %21 : vector<1x128xf32> to vector<128x128xf32>
    %26 = arith.addf %24, %25 : vector<128x128xf32>
    %27 = vector.extract_strided_slice %26 {offsets = [0, 0], sizes = [128, 32], strides = [1, 1]} : vector<128x128xf32> to vector<128x32xf32>
    %28 = vector.extract_strided_slice %26 {offsets = [0, 32], sizes = [128, 32], strides = [1, 1]} : vector<128x128xf32> to vector<128x32xf32>
    %29 = vector.extract_strided_slice %26 {offsets = [0, 64], sizes = [128, 32], strides = [1, 1]} : vector<128x128xf32> to vector<128x32xf32>
    %30 = vector.extract_strided_slice %26 {offsets = [0, 96], sizes = [128, 32], strides = [1, 1]} : vector<128x128xf32> to vector<128x32xf32>
    %31 = arith.truncf %27 : vector<128x32xf32> to vector<128x32xbf16>
    %32 = arith.truncf %28 : vector<128x32xf32> to vector<128x32xbf16>
    %cst_12 = arith.constant dense<0.000000e+00> : vector<128x128xf32>
    %33 = tpu.matmul %31, %32, %cst_12 {dimension_numbers = #tpu.dot_dimension_numbers<[1], [1], [0], [0], [0, 0, 1, 0], [], []>} : vector<128x32xbf16>, vector<128x32xbf16>, vector<128x128xf32> -> vector<128x128xf32>
    %34 = arith.addf %33, %12 : vector<128x128xf32>
    %cst_13 = arith.constant dense<0xFF800000> : vector<128xf32>
    %35 = vector.multi_reduction <maximumf>, %34, %cst_13 [1] : vector<128x128xf32> to vector<128xf32>
    %36 = vector.shape_cast %35 : vector<128xf32> to vector<128x1xf32>
    %37 = vector.broadcast %36 : vector<128x1xf32> to vector<128x128xf32>
    %38 = arith.subf %34, %37 : vector<128x128xf32>
    %39 = math.exp %38 : vector<128x128xf32>
    %cst_14 = arith.constant dense<0.000000e+00> : vector<128xf32>
    %40 = vector.multi_reduction <add>, %39, %cst_14 [1] : vector<128x128xf32> to vector<128xf32>
    %41 = vector.shape_cast %40 : vector<128xf32> to vector<128x1xf32>
    %42 = tpu.reciprocal %41 {approx = true} : vector<128x1xf32> -> vector<128x1xf32>
    %43 = arith.mulf %42, %18 : vector<128x1xf32>
    %44 = arith.truncf %39 : vector<128x128xf32> to vector<128x128xbf16>
    %45 = arith.truncf %29 : vector<128x32xf32> to vector<128x32xbf16>
    %cst_15 = arith.constant dense<0.000000e+00> : vector<128x32xf32>
    %46 = tpu.matmul %44, %45, %cst_15 {dimension_numbers = #tpu.dot_dimension_numbers<[1], [0], [0], [1], [0, 0, 1, 1], [], []>} : vector<128x128xbf16>, vector<128x32xbf16>, vector<128x32xf32> -> vector<128x32xf32>
    %47 = vector.broadcast %43 : vector<128x1xf32> to vector<128x32xf32>
    %48 = arith.mulf %46, %47 : vector<128x32xf32>
    %49 = arith.addf %48, %30 : vector<128x32xf32>
    %cst_16 = arith.constant 0.000000e+00 : f32
    %50 = vector.broadcast %cst_16 : f32 to vector<128x32xf32>
    %51 = arith.maximumf %49, %50 : vector<128x32xf32>
    %c56 = arith.constant 56 : index
    %c0_17 = arith.constant 0 : index
    %52 = vector.load %arg3[%c56, %c0_17] : memref<136x128xf32, #tpu.memory_space<vmem>>, vector<32x128xf32>
    %53 = vector.extract_strided_slice %19 {offsets = [1, 0], sizes = [1, 128], strides = [1, 1]} : vector<8x128xf32> to vector<1x128xf32>
    %54 = arith.truncf %51 : vector<128x32xf32> to vector<128x32xbf16>
    %55 = arith.truncf %52 : vector<32x128xf32> to vector<32x128xbf16>
    %cst_18 = arith.constant dense<0.000000e+00> : vector<128x128xf32>
    %56 = tpu.matmul %54, %55, %cst_18 {dimension_numbers = #tpu.dot_dimension_numbers<[1], [0], [0], [1], [0, 0, 1, 1], [], []>} : vector<128x32xbf16>, vector<32x128xbf16>, vector<128x128xf32> -> vector<128x128xf32>
    %57 = vector.broadcast %53 : vector<1x128xf32> to vector<128x128xf32>
    %58 = arith.addf %56, %57 : vector<128x128xf32>
    %59 = vector.extract_strided_slice %58 {offsets = [0, 0], sizes = [128, 32], strides = [1, 1]} : vector<128x128xf32> to vector<128x32xf32>
    %60 = vector.extract_strided_slice %58 {offsets = [0, 32], sizes = [128, 32], strides = [1, 1]} : vector<128x128xf32> to vector<128x32xf32>
    %61 = vector.extract_strided_slice %58 {offsets = [0, 64], sizes = [128, 32], strides = [1, 1]} : vector<128x128xf32> to vector<128x32xf32>
    %62 = vector.extract_strided_slice %58 {offsets = [0, 96], sizes = [128, 32], strides = [1, 1]} : vector<128x128xf32> to vector<128x32xf32>
    %63 = arith.truncf %59 : vector<128x32xf32> to vector<128x32xbf16>
    %64 = arith.truncf %60 : vector<128x32xf32> to vector<128x32xbf16>
    %cst_19 = arith.constant dense<0.000000e+00> : vector<128x128xf32>
    %65 = tpu.matmul %63, %64, %cst_19 {dimension_numbers = #tpu.dot_dimension_numbers<[1], [1], [0], [0], [0, 0, 1, 0], [], []>} : vector<128x32xbf16>, vector<128x32xbf16>, vector<128x128xf32> -> vector<128x128xf32>
    %66 = arith.addf %65, %12 : vector<128x128xf32>
    %cst_20 = arith.constant dense<0xFF800000> : vector<128xf32>
    %67 = vector.multi_reduction <maximumf>, %66, %cst_20 [1] : vector<128x128xf32> to vector<128xf32>
    %68 = vector.shape_cast %67 : vector<128xf32> to vector<128x1xf32>
    %69 = vector.broadcast %68 : vector<128x1xf32> to vector<128x128xf32>
    %70 = arith.subf %66, %69 : vector<128x128xf32>
    %71 = math.exp %70 : vector<128x128xf32>
    %cst_21 = arith.constant dense<0.000000e+00> : vector<128xf32>
    %72 = vector.multi_reduction <add>, %71, %cst_21 [1] : vector<128x128xf32> to vector<128xf32>
    %73 = vector.shape_cast %72 : vector<128xf32> to vector<128x1xf32>
    %74 = tpu.reciprocal %73 {approx = true} : vector<128x1xf32> -> vector<128x1xf32>
    %75 = arith.mulf %74, %18 : vector<128x1xf32>
    %76 = arith.truncf %71 : vector<128x128xf32> to vector<128x128xbf16>
    %77 = arith.truncf %61 : vector<128x32xf32> to vector<128x32xbf16>
    %cst_22 = arith.constant dense<0.000000e+00> : vector<128x32xf32>
    %78 = tpu.matmul %76, %77, %cst_22 {dimension_numbers = #tpu.dot_dimension_numbers<[1], [0], [0], [1], [0, 0, 1, 1], [], []>} : vector<128x128xbf16>, vector<128x32xbf16>, vector<128x32xf32> -> vector<128x32xf32>
    %79 = vector.broadcast %75 : vector<128x1xf32> to vector<128x32xf32>
    %80 = arith.mulf %78, %79 : vector<128x32xf32>
    %81 = arith.addf %80, %62 : vector<128x32xf32>
    %cst_23 = arith.constant 0.000000e+00 : f32
    %82 = vector.broadcast %cst_23 : f32 to vector<128x32xf32>
    %83 = arith.maximumf %81, %82 : vector<128x32xf32>
    %c96 = arith.constant 96 : index
    %c0_24 = arith.constant 0 : index
    %84 = vector.load %arg3[%c96, %c0_24] : memref<136x128xf32, #tpu.memory_space<vmem>>, vector<32x128xf32>
    %c128 = arith.constant 128 : index
    %c0_25 = arith.constant 0 : index
    %85 = vector.load %arg3[%c128, %c0_25] : memref<136x128xf32, #tpu.memory_space<vmem>>, vector<8x128xf32>
    %86 = vector.extract_strided_slice %85 {offsets = [0, 0], sizes = [1, 128], strides = [1, 1]} : vector<8x128xf32> to vector<1x128xf32>
    %87 = arith.truncf %83 : vector<128x32xf32> to vector<128x32xbf16>
    %88 = arith.truncf %84 : vector<32x128xf32> to vector<32x128xbf16>
    %cst_26 = arith.constant dense<0.000000e+00> : vector<128x128xf32>
    %89 = tpu.matmul %87, %88, %cst_26 {dimension_numbers = #tpu.dot_dimension_numbers<[1], [0], [0], [1], [0, 0, 1, 1], [], []>} : vector<128x32xbf16>, vector<32x128xbf16>, vector<128x128xf32> -> vector<128x128xf32>
    %90 = vector.broadcast %86 : vector<1x128xf32> to vector<128x128xf32>
    %91 = arith.addf %89, %90 : vector<128x128xf32>
    %cst_27 = arith.constant dense<0xFF800000> : vector<128xf32>
    %92 = vector.multi_reduction <maximumf>, %91, %cst_27 [1] : vector<128x128xf32> to vector<128xf32>
    %93 = vector.shape_cast %92 : vector<128xf32> to vector<128x1xf32>
    %94 = vector.broadcast %93 : vector<128x1xf32> to vector<128x128xf32>
    %95 = arith.subf %91, %94 : vector<128x128xf32>
    %96 = math.exp %95 : vector<128x128xf32>
    %cst_28 = arith.constant dense<0.000000e+00> : vector<128xf32>
    %97 = vector.multi_reduction <add>, %96, %cst_28 [1] : vector<128x128xf32> to vector<128xf32>
    %98 = vector.shape_cast %97 : vector<128xf32> to vector<128x1xf32>
    %99 = math.log %98 : vector<128x1xf32>
    %100 = vector.broadcast %99 : vector<128x1xf32> to vector<128x128xf32>
    %101 = arith.subf %95, %100 : vector<128x128xf32>
    %c0_29 = arith.constant 0 : index
    %c0_30 = arith.constant 0 : index
    %102 = vector.load %arg4[%c0_29, %c0_30] : memref<128x128xf32, #tpu.memory_space<vmem>>, vector<128x128xf32>
    tpu.vector_store %arg4[%c0_29, %c0_30], %101 {strides = array<i32>} : memref<128x128xf32, #tpu.memory_space<vmem>>, vector<128x128xf32>,
    return
  }
  func.func @transform_0(%arg0: i32) -> (i32, i32) {
    %c0_i32 = arith.constant 0 : i32
    %c0_i32_0 = arith.constant 0 : i32
    return %arg0, %c0_i32 : i32, i32
  }
  func.func @transform_1(%arg0: i32) -> (i32, i32) {
    %c0_i32 = arith.constant 0 : i32
    return %arg0, %arg0 : i32, i32
  }
  func.func @transform_2(%arg0: i32) -> (i32, i32) {
    %c0_i32 = arith.constant 0 : i32
    %c0_i32_0 = arith.constant 0 : i32
    %c0_i32_1 = arith.constant 0 : i32
    return %c0_i32, %c0_i32_0 : i32, i32
  }
  func.func @transform_3(%arg0: i32) -> (i32, i32) {
    %c0_i32 = arith.constant 0 : i32
    %c0_i32_0 = arith.constant 0 : i32
    return %arg0, %c0_i32 : i32, i32
  }
}

</mosaic_0001>

<llo_original>
// kernel: tpu_custom_call.1
$region0: #{tpu_custom_call.1}
  #allocation0 [shape = 'u32[]', space=smem, size = 0x4, offset = 0x4, fixed_abs, tag = 'smem constant byte address 0x4 - core index']
  #allocation1 [shape = 'u32[144,128]{1,0:T(1,128)}', space=vmem, size = 0x12000, scoped, tag = 'internal scratch']
  %s0 = inlined_call_operand.vmem [shape: f32[256,16], index: 0, kind: input, shape index: {}]
  %s1 = inlined_call_operand.hbm [shape: f32[256,256], index: 1, kind: input, shape index: {}]
  %s2 = inlined_call_operand.vmem [shape: f32[136,128], index: 2, kind: input, shape index: {}]
  %s3 = inlined_call_operand.hbm [shape: f32[256,128], index: 3, kind: output, shape index: {}]
  %s4 = sld [smem:[#allocation0]]
  $region49: #{tpu_custom_call.1} parent=0
    _
  %s6 = ssub.s32 1, %s4
  %s7 = scalar_select 0, %s6, %s4
  $region1: #{tpu_custom_call.1} parent=0
    #allocation2 [shape = 'u8[131072]{0}', space=vmem, size = 0x20000, scoped, tag = 'input window, operand 1']
    #allocation3 [shape = 's32[2]{0}', space=sflag, size = 0x8, scoped, tag = 'scoped memory for tpu_custom_call.1']
    #allocation4 [shape = 's32[2]{0}', space=sflag, size = 0x8, scoped, tag = 'scoped memory for tpu_custom_call.1']
    #allocation5 [shape = 'u8[131072]{0}', space=vmem, size = 0x20000, scoped, tag = 'output window, operand 0']
    %8 = vsyncpa [#allocation3], 0
    %s9 = scalar_lea.sflag [#allocation3], 1
    %10 = vsyncpa %s9, 0
    %11 = vsyncpa [#allocation4], 0
    %s12 = scalar_lea.sflag [#allocation4], 1
    %13 = vsyncpa %s12, 0
    loop: start=0, step=1, limit=4
    $region2: #{tpu_custom_call.1} parent=1 // loop_pre_header
      _
    $region3: #{tpu_custom_call.1} parent=1 // loop_header
      %s15 = sphi 0, %s19
      %p16 = scmp.ge.s32.totalorder %s15, 4
      %s25 = sphi 0, %s27
      %s28 = sphi 0, %s25
      %s29 = sphi 0, %s28
      %s45 = sphi 0, %s29
      %s53 = sphi 0, %s55
      %s56 = sphi 0, %s53
      %s57 = sphi 0, %s56
      %s73 = sphi 0, %s57
      %s77 = sphi 0, %s77
      %s79 = sphi 0, %s77
      %s80 = sphi 0, %s79
      %s94 = sphi 0, %s80
      %s100 = sphi 0, %s102
      %s103 = sphi 0, %s100
      %s104 = sphi 0, %s103
      %s120 = sphi 0, %s104
    $region4: #{tpu_custom_call.1} parent=1 // loop_header_branch
      %18 = sbr.rel (%p16) target = $region8
    $region5: #{tpu_custom_call.1} parent=1 // loop_body
      %s20 = ssub.s32 %s15, 1
      %s21 = ssub.s32 %s15, 2
      %s22 = sadd.s32 %s15, 1
      %s23 = ssub.s32 %s15, %s22
      %p24 = scmp.eq.s32.totalorder %s23, 0
      %s26 = sadd.s32 %s25, 1
      %s27 = scalar_select %p24, %s25, %s26
      %p30 = pneg %p24
      %p31 = scmp.eq.s32.totalorder %s15, 1
      %p32 = por %p30, %p31
      %p33 = scmp.ne.s32.totalorder %s25, %s28
      %p34 = scmp.eq.s32.totalorder %s15, 0
      %p35 = por %p33, %p34
      %p36 = scmp.ne.s32.totalorder %s25, %s28
      %p37 = scmp.eq.s32.totalorder %s20, 1
      %p38 = por %p36, %p37
      %p39 = scmp.ne.s32.totalorder %s28, %s29
      %p40 = scmp.eq.s32.totalorder %s20, 0
      %p41 = por %p39, %p40
      %p42 = scmp.ne.s32.totalorder %s28, %s29
      %p43 = scmp.eq.s32.totalorder %s21, 1
      %p44 = por %p42, %p43
      %p46 = scmp.ne.s32.totalorder %s29, %s45
      %p47 = scmp.eq.s32.totalorder %s21, 0
      %p48 = por %p46, %p47
      %s49 = ssub.s32 %s15, %s22
      %s50 = ssub.s32 %s15, %s22
      %s51 = sor.u32 %s49, %s50
      %p52 = scmp.eq.s32.totalorder %s51, 0
      %s54 = sadd.s32 %s53, 1
      %s55 = scalar_select %p52, %s53, %s54
      %p58 = pneg %p52
      %p59 = scmp.eq.s32.totalorder %s15, 1
      %p60 = por %p58, %p59
      %p61 = scmp.ne.s32.totalorder %s53, %s56
      %p62 = scmp.eq.s32.totalorder %s15, 0
      %p63 = por %p61, %p62
      %p64 = scmp.ne.s32.totalorder %s53, %s56
      %p65 = scmp.eq.s32.totalorder %s20, 1
      %p66 = por %p64, %p65
      %p67 = scmp.ne.s32.totalorder %s56, %s57
      %p68 = scmp.eq.s32.totalorder %s20, 0
      %p69 = por %p67, %p68
      %p70 = scmp.ne.s32.totalorder %s56, %s57
      %p71 = scmp.eq.s32.totalorder %s21, 1
      %p72 = por %p70, %p71
      %p74 = scmp.ne.s32.totalorder %s57, %s73
      %p75 = scmp.eq.s32.totalorder %s21, 0
      %p76 = por %p74, %p75
      %s78 = sadd.s32 %s77, 1
      %p81 = scmp.eq.s32.totalorder %s15, 1
      %p82 = scmp.ne.s32.totalorder %s77, %s79
      %p83 = scmp.eq.s32.totalorder %s15, 0
      %p84 = por %p82, %p83
      %p85 = scmp.ne.s32.totalorder %s77, %s79
      %p86 = scmp.eq.s32.totalorder %s20, 1
      %p87 = por %p85, %p86
      %p88 = scmp.ne.s32.totalorder %s79, %s80
      %p89 = scmp.eq.s32.totalorder %s20, 0
      %p90 = por %p88, %p89
      %p91 = scmp.ne.s32.totalorder %s79, %s80
      %p92 = scmp.eq.s32.totalorder %s21, 1
      %p93 = por %p91, %p92
      %p95 = scmp.ne.s32.totalorder %s80, %s94
      %p96 = scmp.eq.s32.totalorder %s21, 0
      %p97 = por %p95, %p96
      %s98 = ssub.s32 %s15, %s22
      %p99 = scmp.eq.s32.totalorder %s98, 0
      %s101 = sadd.s32 %s100, 1
      %s102 = scalar_select %p99, %s100, %s101
      %p105 = pneg %p99
      %p106 = scmp.eq.s32.totalorder %s15, 1
      %p107 = por %p105, %p106
      %p108 = scmp.ne.s32.totalorder %s100, %s103
      %p109 = scmp.eq.s32.totalorder %s15, 0
      %p110 = por %p108, %p109
      %p111 = scmp.ne.s32.totalorder %s100, %s103
      %p112 = scmp.eq.s32.totalorder %s20, 1
      %p113 = por %p111, %p112
      %p114 = scmp.ne.s32.totalorder %s103, %s104
      %p115 = scmp.eq.s32.totalorder %s20, 0
      %p116 = por %p114, %p115
      %p117 = scmp.ne.s32.totalorder %s103, %s104
      %p118 = scmp.eq.s32.totalorder %s21, 1
      %p119 = por %p117, %p118
      %p121 = scmp.ne.s32.totalorder %s104, %s120
      %p122 = scmp.eq.s32.totalorder %s21, 0
      %p123 = por %p121, %p122
      %p124 = scmp.le.s32.totalorder 1, %s15
      %p125 = scmp.lt.s32.totalorder %s15, 3
      %p126 = pnand %p124, %p125
      %p127 = pneg %p126
      // Predicated region
      $region9: #{tpu_custom_call.1} parent=5 // pred_check
        _
      $region10: #{tpu_custom_call.1} parent=5 // pred_check_branch
        %129 = sbr.rel (%p126) target = $region12
      $region11: #{tpu_custom_call.1} parent=5 // pred_region
        %s130 = ssub.s32 %s15, 1
        // Predicated region
        $region13: #{tpu_custom_call.1} parent=11 // pred_check
          %p131 = pneg %p90
        $region14: #{tpu_custom_call.1} parent=11 // pred_check_branch
          %133 = sbr.rel (%p131) target = $region16
        $region15: #{tpu_custom_call.1} parent=11 // pred_region
          _
        $region16: #{tpu_custom_call.1} parent=11 // pred_fallthru
          _
      $region12: #{tpu_custom_call.1} parent=5 // pred_fallthru
        _
      %p134 = scmp.lt.s32.totalorder %s15, 2
      // Predicated region
      $region17: #{tpu_custom_call.1} parent=5 // pred_check
        %p135 = pneg %p134
      $region18: #{tpu_custom_call.1} parent=5 // pred_check_branch
        %137 = sbr.rel (%p135) target = $region20
      $region19: #{tpu_custom_call.1} parent=5 // pred_region
        // Predicated region
        $region21: #{tpu_custom_call.1} parent=19 // pred_check
          %p138 = pneg %p35
        $region22: #{tpu_custom_call.1} parent=19 // pred_check_branch
          %140 = sbr.rel (%p138) target = $region24
        $region23: #{tpu_custom_call.1} parent=19 // pred_region
          %s141 = smul.u32 16, %s15
          %p142 = scmp.lt.s32.totalorder %s141, 31
          %s143 = scalar_select %p142, %s141, 31
          %s144 = smul.addr %s143, 8
          %s145 = scalar_lea.vmem %s0, %s144
          %s146 = smul.u32 16, %s15
        $region24: #{tpu_custom_call.1} parent=19 // pred_fallthru
          _
        // Predicated region
        $region25: #{tpu_custom_call.1} parent=19 // pred_check
          %p147 = pneg %p63
        $region26: #{tpu_custom_call.1} parent=19 // pred_check_branch
          %149 = sbr.rel (%p147) target = $region28
        $region27: #{tpu_custom_call.1} parent=19 // pred_region
          %s150 = sand.u32 %s53, 1
          %s151 = scalar_lea.sflag [#allocation3], %s150
          %s152 = sand.u32 %s53, 1
          %s153 = smul.addr %s152, 128
          %s154 = scalar_lea.vmem [#allocation2], %s153
          %s155 = smul.u32 16, %s15
          %s157 = ssub.s32 2048, 2048
          %158 = vsyncadd %s151, %s157
          %s159 = smul.addr %s155, 2
          %s160 = sadd.s32 %s15, %s159
          %s161 = smul.addr %s160, 128
          %s162 = scalar_lea.hbm %s1, %s161
          %s163 = sshll.u32 %s154, 4
          %s164 = int_to_ptr.vmem [resolvable:$true] %s163
          %169 = dma.hbm_to_vmem [thread:$0]  %s162, 2048, %s164, %s151, 256, 128, 8
        $region28: #{tpu_custom_call.1} parent=19 // pred_fallthru
          _
      $region20: #{tpu_custom_call.1} parent=5 // pred_fallthru
        _
      %p170 = scmp.le.s32.totalorder 1, %s15
      %p171 = scmp.lt.s32.totalorder %s15, 3
      %p172 = pnand %p170, %p171
      %p173 = pneg %p172
      // Predicated region
      $region29: #{tpu_custom_call.1} parent=5 // pred_check
        _
      $region30: #{tpu_custom_call.1} parent=5 // pred_check_branch
        %175 = sbr.rel (%p172) target = $region32
      $region31: #{tpu_custom_call.1} parent=5 // pred_region
        %s176 = ssub.s32 %s15, 1
        %s177 = sand.u32 %s56, 1
        %s178 = scalar_lea.sflag [#allocation3], %s177
        %s179 = sand.u32 %s56, 1
        %s180 = smul.addr %s179, 128
        %s181 = scalar_lea.vmem [#allocation2], %s180
        // Predicated region
        $region33: #{tpu_custom_call.1} parent=31 // pred_check
          %p182 = pneg %p69
        $region34: #{tpu_custom_call.1} parent=31 // pred_check_branch
          %184 = sbr.rel (%p182) target = $region36
        $region35: #{tpu_custom_call.1} parent=31 // pred_region
          %185 = dma.done %s178, 2048
        $region36: #{tpu_custom_call.1} parent=31 // pred_fallthru
          _
        %s186 = smul.u32 16, %s20
        %p187 = scmp.lt.s32.totalorder %s186, 31
        %s188 = scalar_select %p187, %s186, 31
        %s189 = smul.addr %s188, 8
        %s190 = scalar_lea.vmem %s0, %s189
        %p191 = pneg %p41
        %p192 = pneg %p38
        %s193 = sand.u32 %s56, 1
        %s194 = scalar_lea.sflag [#allocation3], %s193
        %s195 = sand.u32 %s56, 1
        %s196 = smul.addr %s195, 128
        %s197 = scalar_lea.vmem [#allocation2], %s196
        %p198 = pneg %p69
        %p199 = pneg %p66
        %p200 = pneg %p90
        %p201 = pneg %p87
        %p202 = pneg %p116
        %p203 = pneg %p113
        %s204 = sand.u32 %s103, 1
        %s205 = scalar_lea.sflag [#allocation4], %s204
        %s206 = sand.u32 %s103, 1
        %s207 = smul.addr %s206, 128
        %s208 = scalar_lea.vmem [#allocation5], %s207
        %s209 = smul.u32 16, %s20
        %p210 = scmp.lt.s32.totalorder %s209, 31
        %s211 = scalar_select %p210, %s209, 31
        %s212 = smul.addr %s211, 8
        %s213 = scalar_lea.vmem %s0, %s212
        %s214 = smul.u32 16, %s20
        %s215 = smul.u32 16, %s20
        %s216 = smul.u32 16, %s20
        %v218 = vld [vmem:[%s2] sm:$0xff]
        %v219 = vld [vmem:[%s2 + $0x8] sm:$0xff]
        %v220 = vld [vmem:[%s2 + $0x10] sm:$0xff]
        %v221 = vld [vmem:[%s213] sm:$0xff]
        %v222 = vld [vmem:[%s213 + $0x8] sm:$0xff]
        %v223 = vld [vmem:[%s213 + $0x10] sm:$0xff]
        %v224 = vld [vmem:[%s213 + $0x18] sm:$0xff]
        %v225 = vld [vmem:[%s213 + $0x20] sm:$0xff]
        %v226 = vld [vmem:[%s213 + $0x28] sm:$0xff]
        %v227 = vld [vmem:[%s213 + $0x30] sm:$0xff]
        %v228 = vld [vmem:[%s213 + $0x38] sm:$0xff]
        %v229 = vld [vmem:[%s213 + $0x40] sm:$0xff]
        %v230 = vld [vmem:[%s213 + $0x48] sm:$0xff]
        %v231 = vld [vmem:[%s213 + $0x50] sm:$0xff]
        %v232 = vld [vmem:[%s213 + $0x58] sm:$0xff]
        %v233 = vld [vmem:[%s213 + $0x60] sm:$0xff]
        %v234 = vld [vmem:[%s213 + $0x68] sm:$0xff]
        %v235 = vld [vmem:[%s213 + $0x70] sm:$0xff]
        %v236 = vld [vmem:[%s213 + $0x78] sm:$0xff]
        %v237 = vpack.c.bf16 %v222, %v221
        %v238 = vpack.c.bf16 %v224, %v223
        %v239 = vpack.c.bf16 %v226, %v225
        %v240 = vpack.c.bf16 %v228, %v227
        %v241 = vpack.c.bf16 %v230, %v229
        %v242 = vpack.c.bf16 %v232, %v231
        %v243 = vpack.c.bf16 %v234, %v233
        %v244 = vpack.c.bf16 %v236, %v235
        %v245 = vpack.c.bf16 %v219, %v218
        %v246 = vlaneseq
        %v247 = vshrl.u32 %v246, 7
        %v248 = vsub.s32 0, %v247
        %v249 = vrot.slane %v220, %v248
        %vm250 = vcmask 130048
        %v252 = vsel %vm250, %v237, 0
        %v255 = vsel %vm250, %v238, 0
        %v258 = vsel %vm250, %v239, 0
        %v261 = vsel %vm250, %v240, 0
        %v264 = vsel %vm250, %v241, 0
        %v267 = vsel %vm250, %v242, 0
        %v270 = vsel %vm250, %v243, 0
        %v273 = vsel %vm250, %v244, 0
        %275 = vmatprep.subr.bf16.mxu0 0
        %276 = vmatpush1.bf16.msra.mxu0 0
        %277 = vmatprep.subr.bf16.mxu0 0
        %278 = vmatpush1.bf16.msra.mxu0 0
        %279 = vmatprep.subr.bf16.mxu0 0
        %280 = vmatpush1.bf16.msra.mxu0 0
        %281 = vmatprep.subr.bf16.mxu0 0
        %282 = vmatpush1.bf16.msra.mxu0 0
        %283 = vmatprep.subr.bf16.mxu0 0
        %284 = vmatpush1.bf16.msra.mxu0 0
        %285 = vmatprep.subr.bf16.mxu0 0
        %286 = vmatpush1.bf16.msra.mxu0 0
        %287 = vmatprep.subr.bf16.mxu0 0
        %288 = vmatpush1.bf16.msra.mxu0 0
        %289 = vmatprep.subr.bf16.mxu0 0
        %290 = vmatpush1.bf16.msra.mxu0 %v245
        %291 = vmatprep.subr.bf16.mxu0 0
        %292 = vmatpush2.bf16.msra.mxu0 0
        %293 = vmatprep.subr.bf16.mxu0 0
        %294 = vmatpush2.bf16.msra.mxu0 0
        %295 = vmatprep.subr.bf16.mxu0 0
        %296 = vmatpush2.bf16.msra.mxu0 0
        %297 = vmatprep.subr.bf16.mxu0 0
        %298 = vmatpush2.bf16.msra.mxu0 0
        %299 = vmatprep.subr.bf16.mxu0 0
        %300 = vmatpush2.bf16.msra.mxu0 0
        %301 = vmatprep.subr.bf16.mxu0 0
        %302 = vmatpush2.bf16.msra.mxu0 0
        %303 = vmatprep.subr.bf16.mxu0 0
        %304 = vmatpush2.bf16.msra.mxu0 0
        %305 = vmatprep.subr.bf16.mxu0 0
        %306 = vmatpush2.bf16.msra.mxu0 0
        %307 = vmatprep.mubr.bf16.mxu0 0
        %308 = vmatmul.mubr.bf16.gmra.mxu0 %v252
        %v309 = vpop.f32.mrf.mxu0
        %v310 = vadd.f32 %v249, %v309
        %v311 = vpop.f32.mrf.mxu0
        %v312 = vpop.f32.mrf.mxu0
        %v313 = vadd.f32 %v249, %v312
        %v314 = vpop.f32.mrf.mxu0
        %315 = vmatprep.mubr.bf16.mxu0 0
        %316 = vmatmul.mubr.bf16.gmra.mxu0 %v255
        %v317 = vpop.f32.mrf.mxu0
        %v318 = vadd.f32 %v249, %v317
        %v319 = vpop.f32.mrf.mxu0
        %v320 = vpop.f32.mrf.mxu0
        %v321 = vadd.f32 %v249, %v320
        %v322 = vpop.f32.mrf.mxu0
        %323 = vmatprep.mubr.bf16.mxu0 0
        %324 = vmatmul.mubr.bf16.gmra.mxu0 %v258
        %v325 = vpop.f32.mrf.mxu0
        %v326 = vadd.f32 %v249, %v325
        %v327 = vpop.f32.mrf.mxu0
        %v328 = vpop.f32.mrf.mxu0
        %v329 = vadd.f32 %v249, %v328
        %v330 = vpop.f32.mrf.mxu0
        %331 = vmatprep.mubr.bf16.mxu0 0
        %332 = vmatmul.mubr.bf16.gmra.mxu0 %v261
        %v333 = vpop.f32.mrf.mxu0
        %v334 = vadd.f32 %v249, %v333
        %v335 = vpop.f32.mrf.mxu0
        %v336 = vpop.f32.mrf.mxu0
        %v337 = vadd.f32 %v249, %v336
        %v338 = vpop.f32.mrf.mxu0
        %339 = vmatprep.mubr.bf16.mxu0 0
        %340 = vmatmul.mubr.bf16.gmra.mxu0 %v264
        %v341 = vpop.f32.mrf.mxu0
        %v342 = vadd.f32 %v249, %v341
        %v343 = vpop.f32.mrf.mxu0
        %v344 = vpop.f32.mrf.mxu0
        %v345 = vadd.f32 %v249, %v344
        %v346 = vpop.f32.mrf.mxu0
        %347 = vmatprep.mubr.bf16.mxu0 0
        %348 = vmatmul.mubr.bf16.gmra.mxu0 %v267
        %v349 = vpop.f32.mrf.mxu0
        %v350 = vadd.f32 %v249, %v349
        %v351 = vpop.f32.mrf.mxu0
        %v352 = vpop.f32.mrf.mxu0
        %v353 = vadd.f32 %v249, %v352
        %v354 = vpop.f32.mrf.mxu0
        %355 = vmatprep.mubr.bf16.mxu0 0
        %356 = vmatmul.mubr.bf16.gmra.mxu0 %v270
        %v357 = vpop.f32.mrf.mxu0
        %v358 = vadd.f32 %v249, %v357
        %v359 = vpop.f32.mrf.mxu0
        %v360 = vpop.f32.mrf.mxu0
        %v361 = vadd.f32 %v249, %v360
        %v362 = vpop.f32.mrf.mxu0
        %363 = vmatprep.mubr.bf16.mxu0 0
        %364 = vmatmul.mubr.bf16.gmra.mxu0 %v273
        %v365 = vpop.f32.mrf.mxu0
        %v366 = vadd.f32 %v249, %v365
        %v367 = vpop.f32.mrf.mxu0
        %v368 = vpop.f32.mrf.mxu0
        %v369 = vadd.f32 %v249, %v368
        %v370 = vpop.f32.mrf.mxu0
        %371 = vdwg.mxu0
        %v372 = vmax.f32 %v310, 0.0
        %v373 = vmax.f32 %v313, 0.0
        %v374 = vmax.f32 %v318, 0.0
        %v375 = vmax.f32 %v321, 0.0
        %v376 = vmax.f32 %v326, 0.0
        %v377 = vmax.f32 %v329, 0.0
        %v378 = vmax.f32 %v334, 0.0
        %v379 = vmax.f32 %v337, 0.0
        %v380 = vmax.f32 %v342, 0.0
        %v381 = vmax.f32 %v345, 0.0
        %v382 = vmax.f32 %v350, 0.0
        %v383 = vmax.f32 %v353, 0.0
        %v384 = vmax.f32 %v358, 0.0
        %v385 = vmax.f32 %v361, 0.0
        %v386 = vmax.f32 %v366, 0.0
        %v387 = vmax.f32 %v369, 0.0
        %v388 = vld [vmem:[%s181] sm:$0xff]
        %v389 = vld [vmem:[%s181 + $0x8] sm:$0xff]
        %v390 = vld [vmem:[%s181 + $0x10] sm:$0xff]
        %v391 = vld [vmem:[%s181 + $0x18] sm:$0xff]
        %v392 = vld [vmem:[%s181 + $0x20] sm:$0xff]
        %v393 = vld [vmem:[%s181 + $0x28] sm:$0xff]
        %v394 = vld [vmem:[%s181 + $0x30] sm:$0xff]
        %v395 = vld [vmem:[%s181 + $0x38] sm:$0xff]
        %v396 = vld [vmem:[%s181 + $0x40] sm:$0xff]
        %v397 = vld [vmem:[%s181 + $0x48] sm:$0xff]
        %v398 = vld [vmem:[%s181 + $0x50] sm:$0xff]
        %v399 = vld [vmem:[%s181 + $0x58] sm:$0xff]
        %v400 = vld [vmem:[%s181 + $0x60] sm:$0xff]
        %v401 = vld [vmem:[%s181 + $0x68] sm:$0xff]
        %v402 = vld [vmem:[%s181 + $0x70] sm:$0xff]
        %v403 = vld [vmem:[%s181 + $0x78] sm:$0xff]
        %404 = vmax.xlane.f32.xlu0 %v388
        %v405 = vpop.xlane.xlu0 %404
        %406 = vmax.xlane.f32.xlu0 %v389
        %v407 = vpop.xlane.xlu0 %406
        %408 = vmax.xlane.f32.xlu0 %v390
        %v409 = vpop.xlane.xlu0 %408
        %410 = vmax.xlane.f32.xlu0 %v391
        %v411 = vpop.xlane.xlu0 %410
        %412 = vmax.xlane.f32.xlu0 %v392
        %v413 = vpop.xlane.xlu0 %412
        %414 = vmax.xlane.f32.xlu0 %v393
        %v415 = vpop.xlane.xlu0 %414
        %416 = vmax.xlane.f32.xlu0 %v394
        %v417 = vpop.xlane.xlu0 %416
        %418 = vmax.xlane.f32.xlu0 %v395
        %v419 = vpop.xlane.xlu0 %418
        %420 = vmax.xlane.f32.xlu0 %v396
        %v421 = vpop.xlane.xlu0 %420
        %422 = vmax.xlane.f32.xlu0 %v397
        %v423 = vpop.xlane.xlu0 %422
        %424 = vmax.xlane.f32.xlu0 %v398
        %v425 = vpop.xlane.xlu0 %424
        %426 = vmax.xlane.f32.xlu0 %v399
        %v427 = vpop.xlane.xlu0 %426
        %428 = vmax.xlane.f32.xlu0 %v400
        %v429 = vpop.xlane.xlu0 %428
        %430 = vmax.xlane.f32.xlu0 %v401
        %v431 = vpop.xlane.xlu0 %430
        %432 = vmax.xlane.f32.xlu0 %v402
        %v433 = vpop.xlane.xlu0 %432
        %434 = vmax.xlane.f32.xlu0 %v403
        %v435 = vpop.xlane.xlu0 %434
        %vm436 = vcmp.gt.f32.partialorder %v405, -0.5
        %vm437 = vcmp.gt.f32.partialorder %v407, -0.5
        %vm438 = vcmp.gt.f32.partialorder %v409, -0.5
        %vm439 = vcmp.gt.f32.partialorder %v411, -0.5
        %vm440 = vcmp.gt.f32.partialorder %v413, -0.5
        %vm441 = vcmp.gt.f32.partialorder %v415, -0.5
        %vm442 = vcmp.gt.f32.partialorder %v417, -0.5
        %vm443 = vcmp.gt.f32.partialorder %v419, -0.5
        %vm444 = vcmp.gt.f32.partialorder %v421, -0.5
        %vm445 = vcmp.gt.f32.partialorder %v423, -0.5
        %vm446 = vcmp.gt.f32.partialorder %v425, -0.5
        %vm447 = vcmp.gt.f32.partialorder %v427, -0.5
        %vm448 = vcmp.gt.f32.partialorder %v429, -0.5
        %vm449 = vcmp.gt.f32.partialorder %v431, -0.5
        %vm450 = vcmp.gt.f32.partialorder %v433, -0.5
        %vm451 = vcmp.gt.f32.partialorder %v435, -0.5
        %v452 = vsel %vm436, 1, 0
        %v453 = vsel %vm437, 1, 0
        %v454 = vsel %vm438, 1, 0
        %v455 = vsel %vm439, 1, 0
        %v456 = vsel %vm440, 1, 0
        %v457 = vsel %vm441, 1, 0
        %v458 = vsel %vm442, 1, 0
        %v459 = vsel %vm443, 1, 0
        %v460 = vsel %vm444, 1, 0
        %v461 = vsel %vm445, 1, 0
        %v462 = vsel %vm446, 1, 0
        %v463 = vsel %vm447, 1, 0
        %v464 = vsel %vm448, 1, 0
        %v465 = vsel %vm449, 1, 0
        %v466 = vsel %vm450, 1, 0
        %v467 = vsel %vm451, 1, 0
        %v468 = vcvt.s32.f32 %v452
        %v469 = vcvt.s32.f32 %v453
        %v470 = vcvt.s32.f32 %v454
        %v471 = vcvt.s32.f32 %v455
        %v472 = vcvt.s32.f32 %v456
        %v473 = vcvt.s32.f32 %v457
        %v474 = vcvt.s32.f32 %v458
        %v475 = vcvt.s32.f32 %v459
        %v476 = vcvt.s32.f32 %v460
        %v477 = vcvt.s32.f32 %v461
        %v478 = vcvt.s32.f32 %v462
        %v479 = vcvt.s32.f32 %v463
        %v480 = vcvt.s32.f32 %v464
        %v481 = vcvt.s32.f32 %v465
        %v482 = vcvt.s32.f32 %v466
        %v483 = vcvt.s32.f32 %v467
        %v484 = vld [vmem:[%s2 + $0x58] sm:$0xff]
        %v485 = vld [vmem:[%s2 + $0x18] sm:$0xff]
        %v486 = vld [vmem:[%s2 + $0x20] sm:$0xff]
        %v487 = vld [vmem:[%s2 + $0x28] sm:$0xff]
        %v488 = vld [vmem:[%s2 + $0x30] sm:$0xff]
        %v489 = vpack.c.bf16 %v373, %v372
        %v490 = vpack.c.bf16 %v375, %v374
        %v491 = vpack.c.bf16 %v377, %v376
        %v492 = vpack.c.bf16 %v379, %v378
        %v493 = vpack.c.bf16 %v381, %v380
        %v494 = vpack.c.bf16 %v383, %v382
        %v495 = vpack.c.bf16 %v385, %v384
        %v496 = vpack.c.bf16 %v387, %v386
        %v497 = vpack.c.bf16 %v486, %v485
        %v498 = vpack.c.bf16 %v488, %v487
        %v499 = vlaneseq
        %v500 = vshrl.u32 %v499, 7
        %v501 = vsub.s32 0, %v500
        %v502 = vrot.slane %v484, %v501
        %vm503 = vcmask 261120
        %v505 = vsel %vm503, %v489, 0
        %v508 = vsel %vm503, %v490, 0
        %v511 = vsel %vm503, %v491, 0
        %v514 = vsel %vm503, %v492, 0
        %v517 = vsel %vm503, %v493, 0
        %v520 = vsel %vm503, %v494, 0
        %v523 = vsel %vm503, %v495, 0
        %v526 = vsel %vm503, %v496, 0
        %528 = vmatprep.subr.bf16.mxu0 0
        %529 = vmatpush1.bf16.msra.mxu0 0
        %530 = vmatprep.subr.bf16.mxu0 0
        %531 = vmatpush1.bf16.msra.mxu0 0
        %532 = vmatprep.subr.bf16.mxu0 0
        %533 = vmatpush1.bf16.msra.mxu0 0
        %534 = vmatprep.subr.bf16.mxu0 0
        %535 = vmatpush1.bf16.msra.mxu0 0
        %536 = vmatprep.subr.bf16.mxu0 0
        %537 = vmatpush1.bf16.msra.mxu0 0
        %538 = vmatprep.subr.bf16.mxu0 0
        %539 = vmatpush1.bf16.msra.mxu0 0
        %540 = vmatprep.subr.bf16.mxu0 0
        %541 = vmatpush1.bf16.msra.mxu0 %v498
        %542 = vmatprep.subr.bf16.mxu0 0
        %543 = vmatpush1.bf16.msra.mxu0 %v497
        %544 = vmatprep.subr.bf16.mxu0 0
        %545 = vmatpush2.bf16.msra.mxu0 0
        %546 = vmatprep.subr.bf16.mxu0 0
        %547 = vmatpush2.bf16.msra.mxu0 0
        %548 = vmatprep.subr.bf16.mxu0 0
        %549 = vmatpush2.bf16.msra.mxu0 0
        %550 = vmatprep.subr.bf16.mxu0 0
        %551 = vmatpush2.bf16.msra.mxu0 0
        %552 = vmatprep.subr.bf16.mxu0 0
        %553 = vmatpush2.bf16.msra.mxu0 0
        %554 = vmatprep.subr.bf16.mxu0 0
        %555 = vmatpush2.bf16.msra.mxu0 0
        %556 = vmatprep.subr.bf16.mxu0 0
        %557 = vmatpush2.bf16.msra.mxu0 0
        %558 = vmatprep.subr.bf16.mxu0 0
        %559 = vmatpush2.bf16.msra.mxu0 0
        %560 = vmatprep.mubr.bf16.mxu0 0
        %561 = vmatmul.mubr.bf16.gmra.mxu0 %v505
        %v562 = vpop.f32.mrf.mxu0
        %v563 = vadd.f32 %v502, %v562
        %v564 = vpop.f32.mrf.mxu0
        %v565 = vpop.f32.mrf.mxu0
        %v566 = vadd.f32 %v502, %v565
        %v567 = vpop.f32.mrf.mxu0
        %568 = vmatprep.mubr.bf16.mxu0 0
        %569 = vmatmul.mubr.bf16.gmra.mxu0 %v508
        %v570 = vpop.f32.mrf.mxu0
        %v571 = vadd.f32 %v502, %v570
        %v572 = vpop.f32.mrf.mxu0
        %v573 = vpop.f32.mrf.mxu0
        %v574 = vadd.f32 %v502, %v573
        %v575 = vpop.f32.mrf.mxu0
        %576 = vmatprep.mubr.bf16.mxu0 0
        %577 = vmatmul.mubr.bf16.gmra.mxu0 %v511
        %v578 = vpop.f32.mrf.mxu0
        %v579 = vadd.f32 %v502, %v578
        %v580 = vpop.f32.mrf.mxu0
        %v581 = vpop.f32.mrf.mxu0
        %v582 = vadd.f32 %v502, %v581
        %v583 = vpop.f32.mrf.mxu0
        %584 = vmatprep.mubr.bf16.mxu0 0
        %585 = vmatmul.mubr.bf16.gmra.mxu0 %v514
        %v586 = vpop.f32.mrf.mxu0
        %v587 = vadd.f32 %v502, %v586
        %v588 = vpop.f32.mrf.mxu0
        %v589 = vpop.f32.mrf.mxu0
        %v590 = vadd.f32 %v502, %v589
        %v591 = vpop.f32.mrf.mxu0
        %592 = vmatprep.mubr.bf16.mxu0 0
        %593 = vmatmul.mubr.bf16.gmra.mxu0 %v517
        %v594 = vpop.f32.mrf.mxu0
        %v595 = vadd.f32 %v502, %v594
        %v596 = vpop.f32.mrf.mxu0
        %v597 = vpop.f32.mrf.mxu0
        %v598 = vadd.f32 %v502, %v597
        %v599 = vpop.f32.mrf.mxu0
        %600 = vmatprep.mubr.bf16.mxu0 0
        %601 = vmatmul.mubr.bf16.gmra.mxu0 %v520
        %v602 = vpop.f32.mrf.mxu0
        %v603 = vadd.f32 %v502, %v602
        %v604 = vpop.f32.mrf.mxu0
        %v605 = vpop.f32.mrf.mxu0
        %v606 = vadd.f32 %v502, %v605
        %v607 = vpop.f32.mrf.mxu0
        %608 = vmatprep.mubr.bf16.mxu0 0
        %609 = vmatmul.mubr.bf16.gmra.mxu0 %v523
        %v610 = vpop.f32.mrf.mxu0
        %v611 = vadd.f32 %v502, %v610
        %v612 = vpop.f32.mrf.mxu0
        %v613 = vpop.f32.mrf.mxu0
        %v614 = vadd.f32 %v502, %v613
        %v615 = vpop.f32.mrf.mxu0
        %616 = vmatprep.mubr.bf16.mxu0 0
        %617 = vmatmul.mubr.bf16.gmra.mxu0 %v526
        %v618 = vpop.f32.mrf.mxu0
        %v619 = vadd.f32 %v502, %v618
        %v620 = vpop.f32.mrf.mxu0
        %v621 = vpop.f32.mrf.mxu0
        %v622 = vadd.f32 %v502, %v621
        %v623 = vpop.f32.mrf.mxu0
        %624 = vdwg.mxu0
        %v625 = vpack.c.bf16 %v566, %v563
        %v626 = vpack.c.bf16 %v574, %v571
        %v627 = vpack.c.bf16 %v582, %v579
        %v628 = vpack.c.bf16 %v590, %v587
        %v629 = vpack.c.bf16 %v598, %v595
        %v630 = vpack.c.bf16 %v606, %v603
        %v631 = vpack.c.bf16 %v614, %v611
        %v632 = vpack.c.bf16 %v622, %v619
        %641 = vrot.lane.b32.xlu0 %v625, 96
        %v642 = vpop.permute.xlu0 %641
        %643 = vrot.lane.b32.xlu0 %v626, 96
        %v644 = vpop.permute.xlu0 %643
        %645 = vrot.lane.b32.xlu0 %v627, 96
        %v646 = vpop.permute.xlu0 %645
        %647 = vrot.lane.b32.xlu0 %v628, 96
        %v648 = vpop.permute.xlu0 %647
        %649 = vrot.lane.b32.xlu0 %v629, 96
        %v650 = vpop.permute.xlu0 %649
        %651 = vrot.lane.b32.xlu0 %v630, 96
        %v652 = vpop.permute.xlu0 %651
        %653 = vrot.lane.b32.xlu0 %v631, 96
        %v654 = vpop.permute.xlu0 %653
        %655 = vrot.lane.b32.xlu0 %v632, 96
        %v656 = vpop.permute.xlu0 %655
        %v658 = vsel %vm503, %v625, 0
        %v661 = vsel %vm503, %v626, 0
        %v664 = vsel %vm503, %v627, 0
        %v667 = vsel %vm503, %v628, 0
        %v670 = vsel %vm503, %v629, 0
        %v673 = vsel %vm503, %v630, 0
        %v676 = vsel %vm503, %v631, 0
        %v679 = vsel %vm503, %v632, 0
        %v682 = vsel %vm503, %v642, 0
        %v685 = vsel %vm503, %v644, 0
        %v688 = vsel %vm503, %v646, 0
        %v691 = vsel %vm503, %v648, 0
        %v694 = vsel %vm503, %v650, 0
        %v697 = vsel %vm503, %v652, 0
        %v700 = vsel %vm503, %v654, 0
        %v703 = vsel %vm503, %v656, 0
        %705 = vmatprep.subr.bf16.mxu0 0
        %706 = vmatpush1.bf16.xpose.msra.mxu0 %v703
        %707 = vmatprep.subr.bf16.mxu0 0
        %708 = vmatpush1.bf16.xpose.msra.mxu0 %v700
        %709 = vmatprep.subr.bf16.mxu0 0
        %710 = vmatpush1.bf16.xpose.msra.mxu0 %v697
        %711 = vmatprep.subr.bf16.mxu0 0
        %712 = vmatpush1.bf16.xpose.msra.mxu0 %v694
        %713 = vmatprep.subr.bf16.mxu0 0
        %714 = vmatpush1.bf16.xpose.msra.mxu0 %v691
        %715 = vmatprep.subr.bf16.mxu0 0
        %716 = vmatpush1.bf16.xpose.msra.mxu0 %v688
        %717 = vmatprep.subr.bf16.mxu0 0
        %718 = vmatpush1.bf16.xpose.msra.mxu0 %v685
        %719 = vmatprep.subr.bf16.mxu0 0
        %720 = vmatpush1.bf16.xpose.msra.mxu0 %v682
        %721 = vmatprep.subr.bf16.mxu0 0
        %722 = vmatpush2.bf16.xpose.msra.mxu0 0
        %723 = vmatprep.subr.bf16.mxu0 0
        %724 = vmatpush2.bf16.xpose.msra.mxu0 0
        %725 = vmatprep.subr.bf16.mxu0 0
        %726 = vmatpush2.bf16.xpose.msra.mxu0 0
        %727 = vmatprep.subr.bf16.mxu0 0
        %728 = vmatpush2.bf16.xpose.msra.mxu0 0
        %729 = vmatprep.subr.bf16.mxu0 0
        %730 = vmatpush2.bf16.xpose.msra.mxu0 0
        %731 = vmatprep.subr.bf16.mxu0 0
        %732 = vmatpush2.bf16.xpose.msra.mxu0 0
        %733 = vmatprep.subr.bf16.mxu0 0
        %734 = vmatpush2.bf16.xpose.msra.mxu0 0
        %735 = vmatprep.subr.bf16.mxu0 0
        %736 = vmatpush2.bf16.xpose.msra.mxu0 0
        %737 = vmatprep.mubr.bf16.mxu0 0
        %738 = vmatmul.mubr.bf16.gmra.mxu0 %v658
        %v739 = vpop.f32.mrf.mxu0
        %v740 = vadd.f32 %v388, %v739
        %v741 = vpop.f32.mrf.mxu0
        %v742 = vpop.f32.mrf.mxu0
        %v743 = vadd.f32 %v389, %v742
        %v744 = vpop.f32.mrf.mxu0
        %745 = vmatprep.mubr.bf16.mxu0 0
        %746 = vmatmul.mubr.bf16.gmra.mxu0 %v661
        %v747 = vpop.f32.mrf.mxu0
        %v748 = vadd.f32 %v390, %v747
        %v749 = vpop.f32.mrf.mxu0
        %v750 = vpop.f32.mrf.mxu0
        %v751 = vadd.f32 %v391, %v750
        %v752 = vpop.f32.mrf.mxu0
        %753 = vmatprep.mubr.bf16.mxu0 0
        %754 = vmatmul.mubr.bf16.gmra.mxu0 %v664
        %v755 = vpop.f32.mrf.mxu0
        %v756 = vadd.f32 %v392, %v755
        %v757 = vpop.f32.mrf.mxu0
        %v758 = vpop.f32.mrf.mxu0
        %v759 = vadd.f32 %v393, %v758
        %v760 = vpop.f32.mrf.mxu0
        %761 = vmatprep.mubr.bf16.mxu0 0
        %762 = vmatmul.mubr.bf16.gmra.mxu0 %v667
        %v763 = vpop.f32.mrf.mxu0
        %v764 = vadd.f32 %v394, %v763
        %v765 = vpop.f32.mrf.mxu0
        %v766 = vpop.f32.mrf.mxu0
        %v767 = vadd.f32 %v395, %v766
        %v768 = vpop.f32.mrf.mxu0
        %769 = vmatprep.mubr.bf16.mxu0 0
        %770 = vmatmul.mubr.bf16.gmra.mxu0 %v670
        %v771 = vpop.f32.mrf.mxu0
        %v772 = vadd.f32 %v396, %v771
        %v773 = vpop.f32.mrf.mxu0
        %v774 = vpop.f32.mrf.mxu0
        %v775 = vadd.f32 %v397, %v774
        %v776 = vpop.f32.mrf.mxu0
        %777 = vmatprep.mubr.bf16.mxu0 0
        %778 = vmatmul.mubr.bf16.gmra.mxu0 %v673
        %v779 = vpop.f32.mrf.mxu0
        %v780 = vadd.f32 %v398, %v779
        %v781 = vpop.f32.mrf.mxu0
        %v782 = vpop.f32.mrf.mxu0
        %v783 = vadd.f32 %v399, %v782
        %v784 = vpop.f32.mrf.mxu0
        %785 = vmatprep.mubr.bf16.mxu0 0
        %786 = vmatmul.mubr.bf16.gmra.mxu0 %v676
        %v787 = vpop.f32.mrf.mxu0
        %v788 = vadd.f32 %v400, %v787
        %v789 = vpop.f32.mrf.mxu0
        %v790 = vpop.f32.mrf.mxu0
        %v791 = vadd.f32 %v401, %v790
        %v792 = vpop.f32.mrf.mxu0
        %793 = vmatprep.mubr.bf16.mxu0 0
        %794 = vmatmul.mubr.bf16.gmra.mxu0 %v679
        %v795 = vpop.f32.mrf.mxu0
        %v796 = vadd.f32 %v402, %v795
        %v797 = vpop.f32.mrf.mxu0
        %v798 = vpop.f32.mrf.mxu0
        %v799 = vadd.f32 %v403, %v798
        %v800 = vpop.f32.mrf.mxu0
        %801 = vdwg.mxu0
        %802 = vmax.xlane.f32.xlu0 %v740
        %v803 = vpop.xlane.xlu0 %802
        %804 = vmax.xlane.f32.xlu0 %v743
        %v805 = vpop.xlane.xlu0 %804
        %806 = vmax.xlane.f32.xlu0 %v748
        %v807 = vpop.xlane.xlu0 %806
        %808 = vmax.xlane.f32.xlu0 %v751
        %v809 = vpop.xlane.xlu0 %808
        %810 = vmax.xlane.f32.xlu0 %v756
        %v811 = vpop.xlane.xlu0 %810
        %812 = vmax.xlane.f32.xlu0 %v759
        %v813 = vpop.xlane.xlu0 %812
        %814 = vmax.xlane.f32.xlu0 %v764
        %v815 = vpop.xlane.xlu0 %814
        %816 = vmax.xlane.f32.xlu0 %v767
        %v817 = vpop.xlane.xlu0 %816
        %818 = vmax.xlane.f32.xlu0 %v772
        %v819 = vpop.xlane.xlu0 %818
        %820 = vmax.xlane.f32.xlu0 %v775
        %v821 = vpop.xlane.xlu0 %820
        %822 = vmax.xlane.f32.xlu0 %v780
        %v823 = vpop.xlane.xlu0 %822
        %824 = vmax.xlane.f32.xlu0 %v783
        %v825 = vpop.xlane.xlu0 %824
        %826 = vmax.xlane.f32.xlu0 %v788
        %v827 = vpop.xlane.xlu0 %826
        %828 = vmax.xlane.f32.xlu0 %v791
        %v829 = vpop.xlane.xlu0 %828
        %830 = vmax.xlane.f32.xlu0 %v796
        %v831 = vpop.xlane.xlu0 %830
        %832 = vmax.xlane.f32.xlu0 %v799
        %v833 = vpop.xlane.xlu0 %832
        %v834 = vsub.f32 %v740, %v803
        %v835 = vsub.f32 %v743, %v805
        %v836 = vsub.f32 %v748, %v807
        %v837 = vsub.f32 %v751, %v809
        %v838 = vsub.f32 %v756, %v811
        %v839 = vsub.f32 %v759, %v813
        %v840 = vsub.f32 %v764, %v815
        %v841 = vsub.f32 %v767, %v817
        %v842 = vsub.f32 %v772, %v819
        %v843 = vsub.f32 %v775, %v821
        %v844 = vsub.f32 %v780, %v823
        %v845 = vsub.f32 %v783, %v825
        %v846 = vsub.f32 %v788, %v827
        %v847 = vsub.f32 %v791, %v829
        %v848 = vsub.f32 %v796, %v831
        %v849 = vsub.f32 %v799, %v833
        %v850 = vmul.f32 %v834, 1.442695
        %v851 = vpow.pop %v850
        %v852 = vmul.f32 %v835, 1.442695
        %v853 = vpow.pop %v852
        %v854 = vmul.f32 %v836, 1.442695
        %v855 = vpow.pop %v854
        %v856 = vmul.f32 %v837, 1.442695
        %v857 = vpow.pop %v856
        %v858 = vmul.f32 %v838, 1.442695
        %v859 = vpow.pop %v858
        %v860 = vmul.f32 %v839, 1.442695
        %v861 = vpow.pop %v860
        %v862 = vmul.f32 %v840, 1.442695
        %v863 = vpow.pop %v862
        %v864 = vmul.f32 %v841, 1.442695
        %v865 = vpow.pop %v864
        %v866 = vmul.f32 %v842, 1.442695
        %v867 = vpow.pop %v866
        %v868 = vmul.f32 %v843, 1.442695
        %v869 = vpow.pop %v868
        %v870 = vmul.f32 %v844, 1.442695
        %v871 = vpow.pop %v870
        %v872 = vmul.f32 %v845, 1.442695
        %v873 = vpow.pop %v872
        %v874 = vmul.f32 %v846, 1.442695
        %v875 = vpow.pop %v874
        %v876 = vmul.f32 %v847, 1.442695
        %v877 = vpow.pop %v876
        %v878 = vmul.f32 %v848, 1.442695
        %v879 = vpow.pop %v878
        %v880 = vmul.f32 %v849, 1.442695
        %v881 = vpow.pop %v880
        %882 = vadd.xlane.f32.xlu0 %v851
        %v883 = vpop.xlane.xlu0 %882
        %884 = vadd.xlane.f32.xlu0 %v853
        %v885 = vpop.xlane.xlu0 %884
        %886 = vadd.xlane.f32.xlu0 %v855
        %v887 = vpop.xlane.xlu0 %886
        %888 = vadd.xlane.f32.xlu0 %v857
        %v889 = vpop.xlane.xlu0 %888
        %890 = vadd.xlane.f32.xlu0 %v859
        %v891 = vpop.xlane.xlu0 %890
        %892 = vadd.xlane.f32.xlu0 %v861
        %v893 = vpop.xlane.xlu0 %892
        %894 = vadd.xlane.f32.xlu0 %v863
        %v895 = vpop.xlane.xlu0 %894
        %896 = vadd.xlane.f32.xlu0 %v865
        %v897 = vpop.xlane.xlu0 %896
        %898 = vadd.xlane.f32.xlu0 %v867
        %v899 = vpop.xlane.xlu0 %898
        %900 = vadd.xlane.f32.xlu0 %v869
        %v901 = vpop.xlane.xlu0 %900
        %902 = vadd.xlane.f32.xlu0 %v871
        %v903 = vpop.xlane.xlu0 %902
        %904 = vadd.xlane.f32.xlu0 %v873
        %v905 = vpop.xlane.xlu0 %904
        %906 = vadd.xlane.f32.xlu0 %v875
        %v907 = vpop.xlane.xlu0 %906
        %908 = vadd.xlane.f32.xlu0 %v877
        %v909 = vpop.xlane.xlu0 %908
        %910 = vadd.xlane.f32.xlu0 %v879
        %v911 = vpop.xlane.xlu0 %910
        %912 = vadd.xlane.f32.xlu0 %v881
        %v913 = vpop.xlane.xlu0 %912
        %v914 = vrcp.pop %v883
        %v915 = vrcp.pop %v885
        %v916 = vrcp.pop %v887
        %v917 = vrcp.pop %v889
        %v918 = vrcp.pop %v891
        %v919 = vrcp.pop %v893
        %v920 = vrcp.pop %v895
        %v921 = vrcp.pop %v897
        %v922 = vrcp.pop %v899
        %v923 = vrcp.pop %v901
        %v924 = vrcp.pop %v903
        %v925 = vrcp.pop %v905
        %v926 = vrcp.pop %v907
        %v927 = vrcp.pop %v909
        %v928 = vrcp.pop %v911
        %v929 = vrcp.pop %v913
        %v930 = vmul.f32 %v914, %v468
        %v931 = vmul.f32 %v915, %v469
        %v932 = vmul.f32 %v916, %v470
        %v933 = vmul.f32 %v917, %v471
        %v934 = vmul.f32 %v918, %v472
        %v935 = vmul.f32 %v919, %v473
        %v936 = vmul.f32 %v920, %v474
        %v937 = vmul.f32 %v921, %v475
        %v938 = vmul.f32 %v922, %v476
        %v939 = vmul.f32 %v923, %v477
        %v940 = vmul.f32 %v924, %v478
        %v941 = vmul.f32 %v925, %v479
        %v942 = vmul.f32 %v926, %v480
        %v943 = vmul.f32 %v927, %v481
        %v944 = vmul.f32 %v928, %v482
        %v945 = vmul.f32 %v929, %v483
        %v946 = vpack.c.bf16 %v853, %v851
        %v947 = vpack.c.bf16 %v857, %v855
        %v948 = vpack.c.bf16 %v861, %v859
        %v949 = vpack.c.bf16 %v865, %v863
        %v950 = vpack.c.bf16 %v869, %v867
        %v951 = vpack.c.bf16 %v873, %v871
        %v952 = vpack.c.bf16 %v877, %v875
        %v953 = vpack.c.bf16 %v881, %v879
        %954 = vrot.lane.b32.xlu0 %v625, 64
        %v955 = vpop.permute.xlu0 %954
        %956 = vrot.lane.b32.xlu0 %v626, 64
        %v957 = vpop.permute.xlu0 %956
        %958 = vrot.lane.b32.xlu0 %v627, 64
        %v959 = vpop.permute.xlu0 %958
        %960 = vrot.lane.b32.xlu0 %v628, 64
        %v961 = vpop.permute.xlu0 %960
        %962 = vrot.lane.b32.xlu0 %v629, 64
        %v963 = vpop.permute.xlu0 %962
        %964 = vrot.lane.b32.xlu0 %v630, 64
        %v965 = vpop.permute.xlu0 %964
        %966 = vrot.lane.b32.xlu0 %v631, 64
        %v967 = vpop.permute.xlu0 %966
        %968 = vrot.lane.b32.xlu0 %v632, 64
        %v969 = vpop.permute.xlu0 %968
        %978 = vmatprep.subr.bf16.mxu0 0
        %979 = vmatpush1.bf16.msra.mxu0 %v969
        %980 = vmatprep.subr.bf16.mxu0 0
        %981 = vmatpush1.bf16.msra.mxu0 %v967
        %982 = vmatprep.subr.bf16.mxu0 0
        %983 = vmatpush1.bf16.msra.mxu0 %v965
        %984 = vmatprep.subr.bf16.mxu0 0
        %985 = vmatpush1.bf16.msra.mxu0 %v963
        %986 = vmatprep.subr.bf16.mxu0 0
        %987 = vmatpush1.bf16.msra.mxu0 %v961
        %988 = vmatprep.subr.bf16.mxu0 0
        %989 = vmatpush1.bf16.msra.mxu0 %v959
        %990 = vmatprep.subr.bf16.mxu0 0
        %991 = vmatpush1.bf16.msra.mxu0 %v957
        %992 = vmatprep.subr.bf16.mxu0 0
        %993 = vmatpush1.bf16.msra.mxu0 %v955
        %994 = vmatprep.subr.bf16.mxu0 0
        %995 = vmatpush2.bf16.msra.mxu0 0
        %996 = vmatprep.subr.bf16.mxu0 0
        %997 = vmatpush2.bf16.msra.mxu0 0
        %998 = vmatprep.subr.bf16.mxu0 0
        %999 = vmatpush2.bf16.msra.mxu0 0
        %1000 = vmatprep.subr.bf16.mxu0 0
        %1001 = vmatpush2.bf16.msra.mxu0 0
        %1002 = vmatprep.subr.bf16.mxu0 0
        %1003 = vmatpush2.bf16.msra.mxu0 0
        %1004 = vmatprep.subr.bf16.mxu0 0
        %1005 = vmatpush2.bf16.msra.mxu0 0
        %1006 = vmatprep.subr.bf16.mxu0 0
        %1007 = vmatpush2.bf16.msra.mxu0 0
        %1008 = vmatprep.subr.bf16.mxu0 0
        %1009 = vmatpush2.bf16.msra.mxu0 0
        %1010 = vmatprep.mubr.bf16.mxu0 0
        %1011 = vmatmul.mubr.bf16.gmra.mxu0 %v946
        %v1012 = vpop.f32.mrf.mxu0
        %v1013 = vadd.f32 0.0, %v1012
        %v1014 = vpop.f32.mrf.mxu0
        %v1015 = vpop.f32.mrf.mxu0
        %v1016 = vadd.f32 0.0, %v1015
        %v1017 = vpop.f32.mrf.mxu0
        %1018 = vmatprep.mubr.bf16.mxu0 0
        %1019 = vmatmul.mubr.bf16.gmra.mxu0 %v947
        %v1020 = vpop.f32.mrf.mxu0
        %v1021 = vadd.f32 0.0, %v1020
        %v1022 = vpop.f32.mrf.mxu0
        %v1023 = vpop.f32.mrf.mxu0
        %v1024 = vadd.f32 0.0, %v1023
        %v1025 = vpop.f32.mrf.mxu0
        %1026 = vmatprep.mubr.bf16.mxu0 0
        %1027 = vmatmul.mubr.bf16.gmra.mxu0 %v948
        %v1028 = vpop.f32.mrf.mxu0
        %v1029 = vadd.f32 0.0, %v1028
        %v1030 = vpop.f32.mrf.mxu0
        %v1031 = vpop.f32.mrf.mxu0
        %v1032 = vadd.f32 0.0, %v1031
        %v1033 = vpop.f32.mrf.mxu0
        %1034 = vmatprep.mubr.bf16.mxu0 0
        %1035 = vmatmul.mubr.bf16.gmra.mxu0 %v949
        %v1036 = vpop.f32.mrf.mxu0
        %v1037 = vadd.f32 0.0, %v1036
        %v1038 = vpop.f32.mrf.mxu0
        %v1039 = vpop.f32.mrf.mxu0
        %v1040 = vadd.f32 0.0, %v1039
        %v1041 = vpop.f32.mrf.mxu0
        %1042 = vmatprep.mubr.bf16.mxu0 0
        %1043 = vmatmul.mubr.bf16.gmra.mxu0 %v950
        %v1044 = vpop.f32.mrf.mxu0
        %v1045 = vadd.f32 0.0, %v1044
        %v1046 = vpop.f32.mrf.mxu0
        %v1047 = vpop.f32.mrf.mxu0
        %v1048 = vadd.f32 0.0, %v1047
        %v1049 = vpop.f32.mrf.mxu0
        %1050 = vmatprep.mubr.bf16.mxu0 0
        %1051 = vmatmul.mubr.bf16.gmra.mxu0 %v951
        %v1052 = vpop.f32.mrf.mxu0
        %v1053 = vadd.f32 0.0, %v1052
        %v1054 = vpop.f32.mrf.mxu0
        %v1055 = vpop.f32.mrf.mxu0
        %v1056 = vadd.f32 0.0, %v1055
        %v1057 = vpop.f32.mrf.mxu0
        %1058 = vmatprep.mubr.bf16.mxu0 0
        %1059 = vmatmul.mubr.bf16.gmra.mxu0 %v952
        %v1060 = vpop.f32.mrf.mxu0
        %v1061 = vadd.f32 0.0, %v1060
        %v1062 = vpop.f32.mrf.mxu0
        %v1063 = vpop.f32.mrf.mxu0
        %v1064 = vadd.f32 0.0, %v1063
        %v1065 = vpop.f32.mrf.mxu0
        %1066 = vmatprep.mubr.bf16.mxu0 0
        %1067 = vmatmul.mubr.bf16.gmra.mxu0 %v953
        %v1068 = vpop.f32.mrf.mxu0
        %v1069 = vadd.f32 0.0, %v1068
        %v1070 = vpop.f32.mrf.mxu0
        %v1071 = vpop.f32.mrf.mxu0
        %v1072 = vadd.f32 0.0, %v1071
        %v1073 = vpop.f32.mrf.mxu0
        %1074 = vdwg.mxu0
        %v1075 = vmul.f32 %v1013, %v930
        %v1076 = vmul.f32 %v1016, %v931
        %v1077 = vmul.f32 %v1021, %v932
        %v1078 = vmul.f32 %v1024, %v933
        %v1079 = vmul.f32 %v1029, %v934
        %v1080 = vmul.f32 %v1032, %v935
        %v1081 = vmul.f32 %v1037, %v936
        %v1082 = vmul.f32 %v1040, %v937
        %v1083 = vmul.f32 %v1045, %v938
        %v1084 = vmul.f32 %v1048, %v939
        %v1085 = vmul.f32 %v1053, %v940
        %v1086 = vmul.f32 %v1056, %v941
        %v1087 = vmul.f32 %v1061, %v942
        %v1088 = vmul.f32 %v1064, %v943
        %v1089 = vmul.f32 %v1069, %v944
        %v1090 = vmul.f32 %v1072, %v945
        %1107 = vrot.lane.b32.xlu0 %v563, 32
        %v1108 = vpop.permute.xlu0 %1107
        %1109 = vrot.lane.b32.xlu0 %v566, 32
        %v1110 = vpop.permute.xlu0 %1109
        %1111 = vrot.lane.b32.xlu0 %v571, 32
        %v1112 = vpop.permute.xlu0 %1111
        %1113 = vrot.lane.b32.xlu0 %v574, 32
        %v1114 = vpop.permute.xlu0 %1113
        %1115 = vrot.lane.b32.xlu0 %v579, 32
        %v1116 = vpop.permute.xlu0 %1115
        %1117 = vrot.lane.b32.xlu0 %v582, 32
        %v1118 = vpop.permute.xlu0 %1117
        %1119 = vrot.lane.b32.xlu0 %v587, 32
        %v1120 = vpop.permute.xlu0 %1119
        %1121 = vrot.lane.b32.xlu0 %v590, 32
        %v1122 = vpop.permute.xlu0 %1121
        %1123 = vrot.lane.b32.xlu0 %v595, 32
        %v1124 = vpop.permute.xlu0 %1123
        %1125 = vrot.lane.b32.xlu0 %v598, 32
        %v1126 = vpop.permute.xlu0 %1125
        %1127 = vrot.lane.b32.xlu0 %v603, 32
        %v1128 = vpop.permute.xlu0 %1127
        %1129 = vrot.lane.b32.xlu0 %v606, 32
        %v1130 = vpop.permute.xlu0 %1129
        %1131 = vrot.lane.b32.xlu0 %v611, 32
        %v1132 = vpop.permute.xlu0 %1131
        %1133 = vrot.lane.b32.xlu0 %v614, 32
        %v1134 = vpop.permute.xlu0 %1133
        %1135 = vrot.lane.b32.xlu0 %v619, 32
        %v1136 = vpop.permute.xlu0 %1135
        %1137 = vrot.lane.b32.xlu0 %v622, 32
        %v1138 = vpop.permute.xlu0 %1137
        %v1155 = vadd.f32 %v1075, %v1108
        %v1156 = vadd.f32 %v1076, %v1110
        %v1157 = vadd.f32 %v1077, %v1112
        %v1158 = vadd.f32 %v1078, %v1114
        %v1159 = vadd.f32 %v1079, %v1116
        %v1160 = vadd.f32 %v1080, %v1118
        %v1161 = vadd.f32 %v1081, %v1120
        %v1162 = vadd.f32 %v1082, %v1122
        %v1163 = vadd.f32 %v1083, %v1124
        %v1164 = vadd.f32 %v1084, %v1126
        %v1165 = vadd.f32 %v1085, %v1128
        %v1166 = vadd.f32 %v1086, %v1130
        %v1167 = vadd.f32 %v1087, %v1132
        %v1168 = vadd.f32 %v1088, %v1134
        %v1169 = vadd.f32 %v1089, %v1136
        %v1170 = vadd.f32 %v1090, %v1138
        %v1171 = vmax.f32 %v1155, 0.0
        %v1172 = vmax.f32 %v1156, 0.0
        %v1173 = vmax.f32 %v1157, 0.0
        %v1174 = vmax.f32 %v1158, 0.0
        %v1175 = vmax.f32 %v1159, 0.0
        %v1176 = vmax.f32 %v1160, 0.0
        %v1177 = vmax.f32 %v1161, 0.0
        %v1178 = vmax.f32 %v1162, 0.0
        %v1179 = vmax.f32 %v1163, 0.0
        %v1180 = vmax.f32 %v1164, 0.0
        %v1181 = vmax.f32 %v1165, 0.0
        %v1182 = vmax.f32 %v1166, 0.0
        %v1183 = vmax.f32 %v1167, 0.0
        %v1184 = vmax.f32 %v1168, 0.0
        %v1185 = vmax.f32 %v1169, 0.0
        %v1186 = vmax.f32 %v1170, 0.0
        %v1187 = vld [vmem:[%s2 + $0x38] sm:$0xff]
        %v1188 = vld [vmem:[%s2 + $0x40] sm:$0xff]
        %v1189 = vld [vmem:[%s2 + $0x48] sm:$0xff]
        %v1190 = vld [vmem:[%s2 + $0x50] sm:$0xff]
        %v1191 = vpack.c.bf16 %v1172, %v1171
        %v1192 = vpack.c.bf16 %v1174, %v1173
        %v1193 = vpack.c.bf16 %v1176, %v1175
        %v1194 = vpack.c.bf16 %v1178, %v1177
        %v1195 = vpack.c.bf16 %v1180, %v1179
        %v1196 = vpack.c.bf16 %v1182, %v1181
        %v1197 = vpack.c.bf16 %v1184, %v1183
        %v1198 = vpack.c.bf16 %v1186, %v1185
        %v1199 = vpack.c.bf16 %v1188, %v1187
        %v1200 = vpack.c.bf16 %v1190, %v1189
        %v1201 = vlaneseq
        %v1202 = vshrl.u32 %v1201, 7
        %v1203 = vsub.s32 1, %v1202
        %v1204 = vrot.slane %v484, %v1203
        %v1206 = vsel %vm503, %v1191, 0
        %v1209 = vsel %vm503, %v1192, 0
        %v1212 = vsel %vm503, %v1193, 0
        %v1215 = vsel %vm503, %v1194, 0
        %v1218 = vsel %vm503, %v1195, 0
        %v1221 = vsel %vm503, %v1196, 0
        %v1224 = vsel %vm503, %v1197, 0
        %v1227 = vsel %vm503, %v1198, 0
        %1229 = vmatprep.subr.bf16.mxu0 0
        %1230 = vmatpush1.bf16.msra.mxu0 0
        %1231 = vmatprep.subr.bf16.mxu0 0
        %1232 = vmatpush1.bf16.msra.mxu0 0
        %1233 = vmatprep.subr.bf16.mxu0 0
        %1234 = vmatpush1.bf16.msra.mxu0 0
        %1235 = vmatprep.subr.bf16.mxu0 0
        %1236 = vmatpush1.bf16.msra.mxu0 0
        %1237 = vmatprep.subr.bf16.mxu0 0
        %1238 = vmatpush1.bf16.msra.mxu0 0
        %1239 = vmatprep.subr.bf16.mxu0 0
        %1240 = vmatpush1.bf16.msra.mxu0 0
        %1241 = vmatprep.subr.bf16.mxu0 0
        %1242 = vmatpush1.bf16.msra.mxu0 %v1200
        %1243 = vmatprep.subr.bf16.mxu0 0
        %1244 = vmatpush1.bf16.msra.mxu0 %v1199
        %1245 = vmatprep.subr.bf16.mxu0 0
        %1246 = vmatpush2.bf16.msra.mxu0 0
        %1247 = vmatprep.subr.bf16.mxu0 0
        %1248 = vmatpush2.bf16.msra.mxu0 0
        %1249 = vmatprep.subr.bf16.mxu0 0
        %1250 = vmatpush2.bf16.msra.mxu0 0
        %1251 = vmatprep.subr.bf16.mxu0 0
        %1252 = vmatpush2.bf16.msra.mxu0 0
        %1253 = vmatprep.subr.bf16.mxu0 0
        %1254 = vmatpush2.bf16.msra.mxu0 0
        %1255 = vmatprep.subr.bf16.mxu0 0
        %1256 = vmatpush2.bf16.msra.mxu0 0
        %1257 = vmatprep.subr.bf16.mxu0 0
        %1258 = vmatpush2.bf16.msra.mxu0 0
        %1259 = vmatprep.subr.bf16.mxu0 0
        %1260 = vmatpush2.bf16.msra.mxu0 0
        %1261 = vmatprep.mubr.bf16.mxu0 0
        %1262 = vmatmul.mubr.bf16.gmra.mxu0 %v1206
        %v1263 = vpop.f32.mrf.mxu0
        %v1264 = vadd.f32 %v1204, %v1263
        %v1265 = vpop.f32.mrf.mxu0
        %v1266 = vpop.f32.mrf.mxu0
        %v1267 = vadd.f32 %v1204, %v1266
        %v1268 = vpop.f32.mrf.mxu0
        %1269 = vmatprep.mubr.bf16.mxu0 0
        %1270 = vmatmul.mubr.bf16.gmra.mxu0 %v1209
        %v1271 = vpop.f32.mrf.mxu0
        %v1272 = vadd.f32 %v1204, %v1271
        %v1273 = vpop.f32.mrf.mxu0
        %v1274 = vpop.f32.mrf.mxu0
        %v1275 = vadd.f32 %v1204, %v1274
        %v1276 = vpop.f32.mrf.mxu0
        %1277 = vmatprep.mubr.bf16.mxu0 0
        %1278 = vmatmul.mubr.bf16.gmra.mxu0 %v1212
        %v1279 = vpop.f32.mrf.mxu0
        %v1280 = vadd.f32 %v1204, %v1279
        %v1281 = vpop.f32.mrf.mxu0
        %v1282 = vpop.f32.mrf.mxu0
        %v1283 = vadd.f32 %v1204, %v1282
        %v1284 = vpop.f32.mrf.mxu0
        %1285 = vmatprep.mubr.bf16.mxu0 0
        %1286 = vmatmul.mubr.bf16.gmra.mxu0 %v1215
        %v1287 = vpop.f32.mrf.mxu0
        %v1288 = vadd.f32 %v1204, %v1287
        %v1289 = vpop.f32.mrf.mxu0
        %v1290 = vpop.f32.mrf.mxu0
        %v1291 = vadd.f32 %v1204, %v1290
        %v1292 = vpop.f32.mrf.mxu0
        %1293 = vmatprep.mubr.bf16.mxu0 0
        %1294 = vmatmul.mubr.bf16.gmra.mxu0 %v1218
        %v1295 = vpop.f32.mrf.mxu0
        %v1296 = vadd.f32 %v1204, %v1295
        %v1297 = vpop.f32.mrf.mxu0
        %v1298 = vpop.f32.mrf.mxu0
        %v1299 = vadd.f32 %v1204, %v1298
        %v1300 = vpop.f32.mrf.mxu0
        %1301 = vmatprep.mubr.bf16.mxu0 0
        %1302 = vmatmul.mubr.bf16.gmra.mxu0 %v1221
        %v1303 = vpop.f32.mrf.mxu0
        %v1304 = vadd.f32 %v1204, %v1303
        %v1305 = vpop.f32.mrf.mxu0
        %v1306 = vpop.f32.mrf.mxu0
        %v1307 = vadd.f32 %v1204, %v1306
        %v1308 = vpop.f32.mrf.mxu0
        %1309 = vmatprep.mubr.bf16.mxu0 0
        %1310 = vmatmul.mubr.bf16.gmra.mxu0 %v1224
        %v1311 = vpop.f32.mrf.mxu0
        %v1312 = vadd.f32 %v1204, %v1311
        %v1313 = vpop.f32.mrf.mxu0
        %v1314 = vpop.f32.mrf.mxu0
        %v1315 = vadd.f32 %v1204, %v1314
        %v1316 = vpop.f32.mrf.mxu0
        %1317 = vmatprep.mubr.bf16.mxu0 0
        %1318 = vmatmul.mubr.bf16.gmra.mxu0 %v1227
        %v1319 = vpop.f32.mrf.mxu0
        %v1320 = vadd.f32 %v1204, %v1319
        %v1321 = vpop.f32.mrf.mxu0
        %v1322 = vpop.f32.mrf.mxu0
        %v1323 = vadd.f32 %v1204, %v1322
        %v1324 = vpop.f32.mrf.mxu0
        %1325 = vdwg.mxu0
        %v1326 = vpack.c.bf16 %v1267, %v1264
        %v1327 = vpack.c.bf16 %v1275, %v1272
        %v1328 = vpack.c.bf16 %v1283, %v1280
        %v1329 = vpack.c.bf16 %v1291, %v1288
        %v1330 = vpack.c.bf16 %v1299, %v1296
        %v1331 = vpack.c.bf16 %v1307, %v1304
        %v1332 = vpack.c.bf16 %v1315, %v1312
        %v1333 = vpack.c.bf16 %v1323, %v1320
        %1342 = vrot.lane.b32.xlu0 %v1326, 96
        %v1343 = vpop.permute.xlu0 %1342
        %1344 = vrot.lane.b32.xlu0 %v1327, 96
        %v1345 = vpop.permute.xlu0 %1344
        %1346 = vrot.lane.b32.xlu0 %v1328, 96
        %v1347 = vpop.permute.xlu0 %1346
        %1348 = vrot.lane.b32.xlu0 %v1329, 96
        %v1349 = vpop.permute.xlu0 %1348
        %1350 = vrot.lane.b32.xlu0 %v1330, 96
        %v1351 = vpop.permute.xlu0 %1350
        %1352 = vrot.lane.b32.xlu0 %v1331, 96
        %v1353 = vpop.permute.xlu0 %1352
        %1354 = vrot.lane.b32.xlu0 %v1332, 96
        %v1355 = vpop.permute.xlu0 %1354
        %1356 = vrot.lane.b32.xlu0 %v1333, 96
        %v1357 = vpop.permute.xlu0 %1356
        %v1359 = vsel %vm503, %v1326, 0
        %v1362 = vsel %vm503, %v1327, 0
        %v1365 = vsel %vm503, %v1328, 0
        %v1368 = vsel %vm503, %v1329, 0
        %v1371 = vsel %vm503, %v1330, 0
        %v1374 = vsel %vm503, %v1331, 0
        %v1377 = vsel %vm503, %v1332, 0
        %v1380 = vsel %vm503, %v1333, 0
        %v1383 = vsel %vm503, %v1343, 0
        %v1386 = vsel %vm503, %v1345, 0
        %v1389 = vsel %vm503, %v1347, 0
        %v1392 = vsel %vm503, %v1349, 0
        %v1395 = vsel %vm503, %v1351, 0
        %v1398 = vsel %vm503, %v1353, 0
        %v1401 = vsel %vm503, %v1355, 0
        %v1404 = vsel %vm503, %v1357, 0
        %1406 = vmatprep.subr.bf16.mxu0 0
        %1407 = vmatpush1.bf16.xpose.msra.mxu0 %v1404
        %1408 = vmatprep.subr.bf16.mxu0 0
        %1409 = vmatpush1.bf16.xpose.msra.mxu0 %v1401
        %1410 = vmatprep.subr.bf16.mxu0 0
        %1411 = vmatpush1.bf16.xpose.msra.mxu0 %v1398
        %1412 = vmatprep.subr.bf16.mxu0 0
        %1413 = vmatpush1.bf16.xpose.msra.mxu0 %v1395
        %1414 = vmatprep.subr.bf16.mxu0 0
        %1415 = vmatpush1.bf16.xpose.msra.mxu0 %v1392
        %1416 = vmatprep.subr.bf16.mxu0 0
        %1417 = vmatpush1.bf16.xpose.msra.mxu0 %v1389
        %1418 = vmatprep.subr.bf16.mxu0 0
        %1419 = vmatpush1.bf16.xpose.msra.mxu0 %v1386
        %1420 = vmatprep.subr.bf16.mxu0 0
        %1421 = vmatpush1.bf16.xpose.msra.mxu0 %v1383
        %1422 = vmatprep.subr.bf16.mxu0 0
        %1423 = vmatpush2.bf16.xpose.msra.mxu0 0
        %1424 = vmatprep.subr.bf16.mxu0 0
        %1425 = vmatpush2.bf16.xpose.msra.mxu0 0
        %1426 = vmatprep.subr.bf16.mxu0 0
        %1427 = vmatpush2.bf16.xpose.msra.mxu0 0
        %1428 = vmatprep.subr.bf16.mxu0 0
        %1429 = vmatpush2.bf16.xpose.msra.mxu0 0
        %1430 = vmatprep.subr.bf16.mxu0 0
        %1431 = vmatpush2.bf16.xpose.msra.mxu0 0
        %1432 = vmatprep.subr.bf16.mxu0 0
        %1433 = vmatpush2.bf16.xpose.msra.mxu0 0
        %1434 = vmatprep.subr.bf16.mxu0 0
        %1435 = vmatpush2.bf16.xpose.msra.mxu0 0
        %1436 = vmatprep.subr.bf16.mxu0 0
        %1437 = vmatpush2.bf16.xpose.msra.mxu0 0
        %1438 = vmatprep.mubr.bf16.mxu0 0
        %1439 = vmatmul.mubr.bf16.gmra.mxu0 %v1359
        %v1440 = vpop.f32.mrf.mxu0
        %v1441 = vadd.f32 %v388, %v1440
        %v1442 = vpop.f32.mrf.mxu0
        %v1443 = vpop.f32.mrf.mxu0
        %v1444 = vadd.f32 %v389, %v1443
        %v1445 = vpop.f32.mrf.mxu0
        %1446 = vmatprep.mubr.bf16.mxu0 0
        %1447 = vmatmul.mubr.bf16.gmra.mxu0 %v1362
        %v1448 = vpop.f32.mrf.mxu0
        %v1449 = vadd.f32 %v390, %v1448
        %v1450 = vpop.f32.mrf.mxu0
        %v1451 = vpop.f32.mrf.mxu0
        %v1452 = vadd.f32 %v391, %v1451
        %v1453 = vpop.f32.mrf.mxu0
        %1454 = vmatprep.mubr.bf16.mxu0 0
        %1455 = vmatmul.mubr.bf16.gmra.mxu0 %v1365
        %v1456 = vpop.f32.mrf.mxu0
        %v1457 = vadd.f32 %v392, %v1456
        %v1458 = vpop.f32.mrf.mxu0
        %v1459 = vpop.f32.mrf.mxu0
        %v1460 = vadd.f32 %v393, %v1459
        %v1461 = vpop.f32.mrf.mxu0
        %1462 = vmatprep.mubr.bf16.mxu0 0
        %1463 = vmatmul.mubr.bf16.gmra.mxu0 %v1368
        %v1464 = vpop.f32.mrf.mxu0
        %v1465 = vadd.f32 %v394, %v1464
        %v1466 = vpop.f32.mrf.mxu0
        %v1467 = vpop.f32.mrf.mxu0
        %v1468 = vadd.f32 %v395, %v1467
        %v1469 = vpop.f32.mrf.mxu0
        %1470 = vmatprep.mubr.bf16.mxu0 0
        %1471 = vmatmul.mubr.bf16.gmra.mxu0 %v1371
        %v1472 = vpop.f32.mrf.mxu0
        %v1473 = vadd.f32 %v396, %v1472
        %v1474 = vpop.f32.mrf.mxu0
        %v1475 = vpop.f32.mrf.mxu0
        %v1476 = vadd.f32 %v397, %v1475
        %v1477 = vpop.f32.mrf.mxu0
        %1478 = vmatprep.mubr.bf16.mxu0 0
        %1479 = vmatmul.mubr.bf16.gmra.mxu0 %v1374
        %v1480 = vpop.f32.mrf.mxu0
        %v1481 = vadd.f32 %v398, %v1480
        %v1482 = vpop.f32.mrf.mxu0
        %v1483 = vpop.f32.mrf.mxu0
        %v1484 = vadd.f32 %v399, %v1483
        %v1485 = vpop.f32.mrf.mxu0
        %1486 = vmatprep.mubr.bf16.mxu0 0
        %1487 = vmatmul.mubr.bf16.gmra.mxu0 %v1377
        %v1488 = vpop.f32.mrf.mxu0
        %v1489 = vadd.f32 %v400, %v1488
        %v1490 = vpop.f32.mrf.mxu0
        %v1491 = vpop.f32.mrf.mxu0
        %v1492 = vadd.f32 %v401, %v1491
        %v1493 = vpop.f32.mrf.mxu0
        %1494 = vmatprep.mubr.bf16.mxu0 0
        %1495 = vmatmul.mubr.bf16.gmra.mxu0 %v1380
        %v1496 = vpop.f32.mrf.mxu0
        %v1497 = vadd.f32 %v402, %v1496
        %v1498 = vpop.f32.mrf.mxu0
        %v1499 = vpop.f32.mrf.mxu0
        %v1500 = vadd.f32 %v403, %v1499
        %v1501 = vpop.f32.mrf.mxu0
        %1502 = vdwg.mxu0
        %1503 = vmax.xlane.f32.xlu0 %v1441
        %v1504 = vpop.xlane.xlu0 %1503
        %1505 = vmax.xlane.f32.xlu0 %v1444
        %v1506 = vpop.xlane.xlu0 %1505
        %1507 = vmax.xlane.f32.xlu0 %v1449
        %v1508 = vpop.xlane.xlu0 %1507
        %1509 = vmax.xlane.f32.xlu0 %v1452
        %v1510 = vpop.xlane.xlu0 %1509
        %1511 = vmax.xlane.f32.xlu0 %v1457
        %v1512 = vpop.xlane.xlu0 %1511
        %1513 = vmax.xlane.f32.xlu0 %v1460
        %v1514 = vpop.xlane.xlu0 %1513
        %1515 = vmax.xlane.f32.xlu0 %v1465
        %v1516 = vpop.xlane.xlu0 %1515
        %1517 = vmax.xlane.f32.xlu0 %v1468
        %v1518 = vpop.xlane.xlu0 %1517
        %1519 = vmax.xlane.f32.xlu0 %v1473
        %v1520 = vpop.xlane.xlu0 %1519
        %1521 = vmax.xlane.f32.xlu0 %v1476
        %v1522 = vpop.xlane.xlu0 %1521
        %1523 = vmax.xlane.f32.xlu0 %v1481
        %v1524 = vpop.xlane.xlu0 %1523
        %1525 = vmax.xlane.f32.xlu0 %v1484
        %v1526 = vpop.xlane.xlu0 %1525
        %1527 = vmax.xlane.f32.xlu0 %v1489
        %v1528 = vpop.xlane.xlu0 %1527
        %1529 = vmax.xlane.f32.xlu0 %v1492
        %v1530 = vpop.xlane.xlu0 %1529
        %1531 = vmax.xlane.f32.xlu0 %v1497
        %v1532 = vpop.xlane.xlu0 %1531
        %1533 = vmax.xlane.f32.xlu0 %v1500
        %v1534 = vpop.xlane.xlu0 %1533
        %v1535 = vsub.f32 %v1441, %v1504
        %v1536 = vsub.f32 %v1444, %v1506
        %v1537 = vsub.f32 %v1449, %v1508
        %v1538 = vsub.f32 %v1452, %v1510
        %v1539 = vsub.f32 %v1457, %v1512
        %v1540 = vsub.f32 %v1460, %v1514
        %v1541 = vsub.f32 %v1465, %v1516
        %v1542 = vsub.f32 %v1468, %v1518
        %v1543 = vsub.f32 %v1473, %v1520
        %v1544 = vsub.f32 %v1476, %v1522
        %v1545 = vsub.f32 %v1481, %v1524
        %v1546 = vsub.f32 %v1484, %v1526
        %v1547 = vsub.f32 %v1489, %v1528
        %v1548 = vsub.f32 %v1492, %v1530
        %v1549 = vsub.f32 %v1497, %v1532
        %v1550 = vsub.f32 %v1500, %v1534
        %v1551 = vmul.f32 %v1535, 1.442695
        %v1552 = vpow.pop %v1551
        %v1553 = vmul.f32 %v1536, 1.442695
        %v1554 = vpow.pop %v1553
        %v1555 = vmul.f32 %v1537, 1.442695
        %v1556 = vpow.pop %v1555
        %v1557 = vmul.f32 %v1538, 1.442695
        %v1558 = vpow.pop %v1557
        %v1559 = vmul.f32 %v1539, 1.442695
        %v1560 = vpow.pop %v1559
        %v1561 = vmul.f32 %v1540, 1.442695
        %v1562 = vpow.pop %v1561
        %v1563 = vmul.f32 %v1541, 1.442695
        %v1564 = vpow.pop %v1563
        %v1565 = vmul.f32 %v1542, 1.442695
        %v1566 = vpow.pop %v1565
        %v1567 = vmul.f32 %v1543, 1.442695
        %v1568 = vpow.pop %v1567
        %v1569 = vmul.f32 %v1544, 1.442695
        %v1570 = vpow.pop %v1569
        %v1571 = vmul.f32 %v1545, 1.442695
        %v1572 = vpow.pop %v1571
        %v1573 = vmul.f32 %v1546, 1.442695
        %v1574 = vpow.pop %v1573
        %v1575 = vmul.f32 %v1547, 1.442695
        %v1576 = vpow.pop %v1575
        %v1577 = vmul.f32 %v1548, 1.442695
        %v1578 = vpow.pop %v1577
        %v1579 = vmul.f32 %v1549, 1.442695
        %v1580 = vpow.pop %v1579
        %v1581 = vmul.f32 %v1550, 1.442695
        %v1582 = vpow.pop %v1581
        %1583 = vadd.xlane.f32.xlu0 %v1552
        %v1584 = vpop.xlane.xlu0 %1583
        %1585 = vadd.xlane.f32.xlu0 %v1554
        %v1586 = vpop.xlane.xlu0 %1585
        %1587 = vadd.xlane.f32.xlu0 %v1556
        %v1588 = vpop.xlane.xlu0 %1587
        %1589 = vadd.xlane.f32.xlu0 %v1558
        %v1590 = vpop.xlane.xlu0 %1589
        %1591 = vadd.xlane.f32.xlu0 %v1560
        %v1592 = vpop.xlane.xlu0 %1591
        %1593 = vadd.xlane.f32.xlu0 %v1562
        %v1594 = vpop.xlane.xlu0 %1593
        %1595 = vadd.xlane.f32.xlu0 %v1564
        %v1596 = vpop.xlane.xlu0 %1595
        %1597 = vadd.xlane.f32.xlu0 %v1566
        %v1598 = vpop.xlane.xlu0 %1597
        %1599 = vadd.xlane.f32.xlu0 %v1568
        %v1600 = vpop.xlane.xlu0 %1599
        %1601 = vadd.xlane.f32.xlu0 %v1570
        %v1602 = vpop.xlane.xlu0 %1601
        %1603 = vadd.xlane.f32.xlu0 %v1572
        %v1604 = vpop.xlane.xlu0 %1603
        %1605 = vadd.xlane.f32.xlu0 %v1574
        %v1606 = vpop.xlane.xlu0 %1605
        %1607 = vadd.xlane.f32.xlu0 %v1576
        %v1608 = vpop.xlane.xlu0 %1607
        %1609 = vadd.xlane.f32.xlu0 %v1578
        %v1610 = vpop.xlane.xlu0 %1609
        %1611 = vadd.xlane.f32.xlu0 %v1580
        %v1612 = vpop.xlane.xlu0 %1611
        %1613 = vadd.xlane.f32.xlu0 %v1582
        %v1614 = vpop.xlane.xlu0 %1613
        %v1615 = vrcp.pop %v1584
        %v1616 = vrcp.pop %v1586
        %v1617 = vrcp.pop %v1588
        %v1618 = vrcp.pop %v1590
        %v1619 = vrcp.pop %v1592
        %v1620 = vrcp.pop %v1594
        %v1621 = vrcp.pop %v1596
        %v1622 = vrcp.pop %v1598
        %v1623 = vrcp.pop %v1600
        %v1624 = vrcp.pop %v1602
        %v1625 = vrcp.pop %v1604
        %v1626 = vrcp.pop %v1606
        %v1627 = vrcp.pop %v1608
        %v1628 = vrcp.pop %v1610
        %v1629 = vrcp.pop %v1612
        %v1630 = vrcp.pop %v1614
        %v1631 = vmul.f32 %v1615, %v468
        %v1632 = vmul.f32 %v1616, %v469
        %v1633 = vmul.f32 %v1617, %v470
        %v1634 = vmul.f32 %v1618, %v471
        %v1635 = vmul.f32 %v1619, %v472
        %v1636 = vmul.f32 %v1620, %v473
        %v1637 = vmul.f32 %v1621, %v474
        %v1638 = vmul.f32 %v1622, %v475
        %v1639 = vmul.f32 %v1623, %v476
        %v1640 = vmul.f32 %v1624, %v477
        %v1641 = vmul.f32 %v1625, %v478
        %v1642 = vmul.f32 %v1626, %v479
        %v1643 = vmul.f32 %v1627, %v480
        %v1644 = vmul.f32 %v1628, %v481
        %v1645 = vmul.f32 %v1629, %v482
        %v1646 = vmul.f32 %v1630, %v483
        %v1647 = vpack.c.bf16 %v1554, %v1552
        %v1648 = vpack.c.bf16 %v1558, %v1556
        %v1649 = vpack.c.bf16 %v1562, %v1560
        %v1650 = vpack.c.bf16 %v1566, %v1564
        %v1651 = vpack.c.bf16 %v1570, %v1568
        %v1652 = vpack.c.bf16 %v1574, %v1572
        %v1653 = vpack.c.bf16 %v1578, %v1576
        %v1654 = vpack.c.bf16 %v1582, %v1580
        %1655 = vrot.lane.b32.xlu0 %v1326, 64
        %v1656 = vpop.permute.xlu0 %1655
        %1657 = vrot.lane.b32.xlu0 %v1327, 64
        %v1658 = vpop.permute.xlu0 %1657
        %1659 = vrot.lane.b32.xlu0 %v1328, 64
        %v1660 = vpop.permute.xlu0 %1659
        %1661 = vrot.lane.b32.xlu0 %v1329, 64
        %v1662 = vpop.permute.xlu0 %1661
        %1663 = vrot.lane.b32.xlu0 %v1330, 64
        %v1664 = vpop.permute.xlu0 %1663
        %1665 = vrot.lane.b32.xlu0 %v1331, 64
        %v1666 = vpop.permute.xlu0 %1665
        %1667 = vrot.lane.b32.xlu0 %v1332, 64
        %v1668 = vpop.permute.xlu0 %1667
        %1669 = vrot.lane.b32.xlu0 %v1333, 64
        %v1670 = vpop.permute.xlu0 %1669
        %1679 = vmatprep.subr.bf16.mxu0 0
        %1680 = vmatpush1.bf16.msra.mxu0 %v1670
        %1681 = vmatprep.subr.bf16.mxu0 0
        %1682 = vmatpush1.bf16.msra.mxu0 %v1668
        %1683 = vmatprep.subr.bf16.mxu0 0
        %1684 = vmatpush1.bf16.msra.mxu0 %v1666
        %1685 = vmatprep.subr.bf16.mxu0 0
        %1686 = vmatpush1.bf16.msra.mxu0 %v1664
        %1687 = vmatprep.subr.bf16.mxu0 0
        %1688 = vmatpush1.bf16.msra.mxu0 %v1662
        %1689 = vmatprep.subr.bf16.mxu0 0
        %1690 = vmatpush1.bf16.msra.mxu0 %v1660
        %1691 = vmatprep.subr.bf16.mxu0 0
        %1692 = vmatpush1.bf16.msra.mxu0 %v1658
        %1693 = vmatprep.subr.bf16.mxu0 0
        %1694 = vmatpush1.bf16.msra.mxu0 %v1656
        %1695 = vmatprep.subr.bf16.mxu0 0
        %1696 = vmatpush2.bf16.msra.mxu0 0
        %1697 = vmatprep.subr.bf16.mxu0 0
        %1698 = vmatpush2.bf16.msra.mxu0 0
        %1699 = vmatprep.subr.bf16.mxu0 0
        %1700 = vmatpush2.bf16.msra.mxu0 0
        %1701 = vmatprep.subr.bf16.mxu0 0
        %1702 = vmatpush2.bf16.msra.mxu0 0
        %1703 = vmatprep.subr.bf16.mxu0 0
        %1704 = vmatpush2.bf16.msra.mxu0 0
        %1705 = vmatprep.subr.bf16.mxu0 0
        %1706 = vmatpush2.bf16.msra.mxu0 0
        %1707 = vmatprep.subr.bf16.mxu0 0
        %1708 = vmatpush2.bf16.msra.mxu0 0
        %1709 = vmatprep.subr.bf16.mxu0 0
        %1710 = vmatpush2.bf16.msra.mxu0 0
        %1711 = vmatprep.mubr.bf16.mxu0 0
        %1712 = vmatmul.mubr.bf16.gmra.mxu0 %v1647
        %v1713 = vpop.f32.mrf.mxu0
        %v1714 = vadd.f32 0.0, %v1713
        %v1715 = vpop.f32.mrf.mxu0
        %v1716 = vpop.f32.mrf.mxu0
        %v1717 = vadd.f32 0.0, %v1716
        %v1718 = vpop.f32.mrf.mxu0
        %1719 = vmatprep.mubr.bf16.mxu0 0
        %1720 = vmatmul.mubr.bf16.gmra.mxu0 %v1648
        %v1721 = vpop.f32.mrf.mxu0
        %v1722 = vadd.f32 0.0, %v1721
        %v1723 = vpop.f32.mrf.mxu0
        %v1724 = vpop.f32.mrf.mxu0
        %v1725 = vadd.f32 0.0, %v1724
        %v1726 = vpop.f32.mrf.mxu0
        %1727 = vmatprep.mubr.bf16.mxu0 0
        %1728 = vmatmul.mubr.bf16.gmra.mxu0 %v1649
        %v1729 = vpop.f32.mrf.mxu0
        %v1730 = vadd.f32 0.0, %v1729
        %v1731 = vpop.f32.mrf.mxu0
        %v1732 = vpop.f32.mrf.mxu0
        %v1733 = vadd.f32 0.0, %v1732
        %v1734 = vpop.f32.mrf.mxu0
        %1735 = vmatprep.mubr.bf16.mxu0 0
        %1736 = vmatmul.mubr.bf16.gmra.mxu0 %v1650
        %v1737 = vpop.f32.mrf.mxu0
        %v1738 = vadd.f32 0.0, %v1737
        %v1739 = vpop.f32.mrf.mxu0
        %v1740 = vpop.f32.mrf.mxu0
        %v1741 = vadd.f32 0.0, %v1740
        %v1742 = vpop.f32.mrf.mxu0
        %1743 = vmatprep.mubr.bf16.mxu0 0
        %1744 = vmatmul.mubr.bf16.gmra.mxu0 %v1651
        %v1745 = vpop.f32.mrf.mxu0
        %v1746 = vadd.f32 0.0, %v1745
        %v1747 = vpop.f32.mrf.mxu0
        %v1748 = vpop.f32.mrf.mxu0
        %v1749 = vadd.f32 0.0, %v1748
        %v1750 = vpop.f32.mrf.mxu0
        %1751 = vmatprep.mubr.bf16.mxu0 0
        %1752 = vmatmul.mubr.bf16.gmra.mxu0 %v1652
        %v1753 = vpop.f32.mrf.mxu0
        %v1754 = vadd.f32 0.0, %v1753
        %v1755 = vpop.f32.mrf.mxu0
        %v1756 = vpop.f32.mrf.mxu0
        %v1757 = vadd.f32 0.0, %v1756
        %v1758 = vpop.f32.mrf.mxu0
        %1759 = vmatprep.mubr.bf16.mxu0 0
        %1760 = vmatmul.mubr.bf16.gmra.mxu0 %v1653
        %v1761 = vpop.f32.mrf.mxu0
        %v1762 = vadd.f32 0.0, %v1761
        %v1763 = vpop.f32.mrf.mxu0
        %v1764 = vpop.f32.mrf.mxu0
        %v1765 = vadd.f32 0.0, %v1764
        %v1766 = vpop.f32.mrf.mxu0
        %1767 = vmatprep.mubr.bf16.mxu0 0
        %1768 = vmatmul.mubr.bf16.gmra.mxu0 %v1654
        %v1769 = vpop.f32.mrf.mxu0
        %v1770 = vadd.f32 0.0, %v1769
        %v1771 = vpop.f32.mrf.mxu0
        %v1772 = vpop.f32.mrf.mxu0
        %v1773 = vadd.f32 0.0, %v1772
        %v1774 = vpop.f32.mrf.mxu0
        %1775 = vdwg.mxu0
        %v1776 = vmul.f32 %v1714, %v1631
        %v1777 = vmul.f32 %v1717, %v1632
        %v1778 = vmul.f32 %v1722, %v1633
        %v1779 = vmul.f32 %v1725, %v1634
        %v1780 = vmul.f32 %v1730, %v1635
        %v1781 = vmul.f32 %v1733, %v1636
        %v1782 = vmul.f32 %v1738, %v1637
        %v1783 = vmul.f32 %v1741, %v1638
        %v1784 = vmul.f32 %v1746, %v1639
        %v1785 = vmul.f32 %v1749, %v1640
        %v1786 = vmul.f32 %v1754, %v1641
        %v1787 = vmul.f32 %v1757, %v1642
        %v1788 = vmul.f32 %v1762, %v1643
        %v1789 = vmul.f32 %v1765, %v1644
        %v1790 = vmul.f32 %v1770, %v1645
        %v1791 = vmul.f32 %v1773, %v1646
        %1808 = vrot.lane.b32.xlu0 %v1264, 32
        %v1809 = vpop.permute.xlu0 %1808
        %1810 = vrot.lane.b32.xlu0 %v1267, 32
        %v1811 = vpop.permute.xlu0 %1810
        %1812 = vrot.lane.b32.xlu0 %v1272, 32
        %v1813 = vpop.permute.xlu0 %1812
        %1814 = vrot.lane.b32.xlu0 %v1275, 32
        %v1815 = vpop.permute.xlu0 %1814
        %1816 = vrot.lane.b32.xlu0 %v1280, 32
        %v1817 = vpop.permute.xlu0 %1816
        %1818 = vrot.lane.b32.xlu0 %v1283, 32
        %v1819 = vpop.permute.xlu0 %1818
        %1820 = vrot.lane.b32.xlu0 %v1288, 32
        %v1821 = vpop.permute.xlu0 %1820
        %1822 = vrot.lane.b32.xlu0 %v1291, 32
        %v1823 = vpop.permute.xlu0 %1822
        %1824 = vrot.lane.b32.xlu0 %v1296, 32
        %v1825 = vpop.permute.xlu0 %1824
        %1826 = vrot.lane.b32.xlu0 %v1299, 32
        %v1827 = vpop.permute.xlu0 %1826
        %1828 = vrot.lane.b32.xlu0 %v1304, 32
        %v1829 = vpop.permute.xlu0 %1828
        %1830 = vrot.lane.b32.xlu0 %v1307, 32
        %v1831 = vpop.permute.xlu0 %1830
        %1832 = vrot.lane.b32.xlu0 %v1312, 32
        %v1833 = vpop.permute.xlu0 %1832
        %1834 = vrot.lane.b32.xlu0 %v1315, 32
        %v1835 = vpop.permute.xlu0 %1834
        %1836 = vrot.lane.b32.xlu0 %v1320, 32
        %v1837 = vpop.permute.xlu0 %1836
        %1838 = vrot.lane.b32.xlu0 %v1323, 32
        %v1839 = vpop.permute.xlu0 %1838
        %v1856 = vadd.f32 %v1776, %v1809
        %v1857 = vadd.f32 %v1777, %v1811
        %v1858 = vadd.f32 %v1778, %v1813
        %v1859 = vadd.f32 %v1779, %v1815
        %v1860 = vadd.f32 %v1780, %v1817
        %v1861 = vadd.f32 %v1781, %v1819
        %v1862 = vadd.f32 %v1782, %v1821
        %v1863 = vadd.f32 %v1783, %v1823
        %v1864 = vadd.f32 %v1784, %v1825
        %v1865 = vadd.f32 %v1785, %v1827
        %v1866 = vadd.f32 %v1786, %v1829
        %v1867 = vadd.f32 %v1787, %v1831
        %v1868 = vadd.f32 %v1788, %v1833
        %v1869 = vadd.f32 %v1789, %v1835
        %v1870 = vadd.f32 %v1790, %v1837
        %v1871 = vadd.f32 %v1791, %v1839
        %v1872 = vmax.f32 %v1856, 0.0
        %v1873 = vmax.f32 %v1857, 0.0
        %v1874 = vmax.f32 %v1858, 0.0
        %v1875 = vmax.f32 %v1859, 0.0
        %v1876 = vmax.f32 %v1860, 0.0
        %v1877 = vmax.f32 %v1861, 0.0
        %v1878 = vmax.f32 %v1862, 0.0
        %v1879 = vmax.f32 %v1863, 0.0
        %v1880 = vmax.f32 %v1864, 0.0
        %v1881 = vmax.f32 %v1865, 0.0
        %v1882 = vmax.f32 %v1866, 0.0
        %v1883 = vmax.f32 %v1867, 0.0
        %v1884 = vmax.f32 %v1868, 0.0
        %v1885 = vmax.f32 %v1869, 0.0
        %v1886 = vmax.f32 %v1870, 0.0
        %v1887 = vmax.f32 %v1871, 0.0
        %v1888 = vld [vmem:[%s2 + $0x60] sm:$0xff]
        %v1889 = vld [vmem:[%s2 + $0x68] sm:$0xff]
        %v1890 = vld [vmem:[%s2 + $0x70] sm:$0xff]
        %v1891 = vld [vmem:[%s2 + $0x78] sm:$0xff]
        %v1892 = vld [vmem:[%s2 + $0x80] sm:$0xff]
        %v1893 = vpack.c.bf16 %v1873, %v1872
        %v1894 = vpack.c.bf16 %v1875, %v1874
        %v1895 = vpack.c.bf16 %v1877, %v1876
        %v1896 = vpack.c.bf16 %v1879, %v1878
        %v1897 = vpack.c.bf16 %v1881, %v1880
        %v1898 = vpack.c.bf16 %v1883, %v1882
        %v1899 = vpack.c.bf16 %v1885, %v1884
        %v1900 = vpack.c.bf16 %v1887, %v1886
        %v1901 = vpack.c.bf16 %v1889, %v1888
        %v1902 = vpack.c.bf16 %v1891, %v1890
        %v1903 = vlaneseq
        %v1904 = vshrl.u32 %v1903, 7
        %v1905 = vsub.s32 0, %v1904
        %v1906 = vrot.slane %v1892, %v1905
        %v1908 = vsel %vm503, %v1893, 0
        %v1911 = vsel %vm503, %v1894, 0
        %v1914 = vsel %vm503, %v1895, 0
        %v1917 = vsel %vm503, %v1896, 0
        %v1920 = vsel %vm503, %v1897, 0
        %v1923 = vsel %vm503, %v1898, 0
        %v1926 = vsel %vm503, %v1899, 0
        %v1929 = vsel %vm503, %v1900, 0
        %1931 = vmatprep.subr.bf16.mxu0 0
        %1932 = vmatpush1.bf16.msra.mxu0 0
        %1933 = vmatprep.subr.bf16.mxu0 0
        %1934 = vmatpush1.bf16.msra.mxu0 0
        %1935 = vmatprep.subr.bf16.mxu0 0
        %1936 = vmatpush1.bf16.msra.mxu0 0
        %1937 = vmatprep.subr.bf16.mxu0 0
        %1938 = vmatpush1.bf16.msra.mxu0 0
        %1939 = vmatprep.subr.bf16.mxu0 0
        %1940 = vmatpush1.bf16.msra.mxu0 0
        %1941 = vmatprep.subr.bf16.mxu0 0
        %1942 = vmatpush1.bf16.msra.mxu0 0
        %1943 = vmatprep.subr.bf16.mxu0 0
        %1944 = vmatpush1.bf16.msra.mxu0 %v1902
        %1945 = vmatprep.subr.bf16.mxu0 0
        %1946 = vmatpush1.bf16.msra.mxu0 %v1901
        %1947 = vmatprep.subr.bf16.mxu0 0
        %1948 = vmatpush2.bf16.msra.mxu0 0
        %1949 = vmatprep.subr.bf16.mxu0 0
        %1950 = vmatpush2.bf16.msra.mxu0 0
        %1951 = vmatprep.subr.bf16.mxu0 0
        %1952 = vmatpush2.bf16.msra.mxu0 0
        %1953 = vmatprep.subr.bf16.mxu0 0
        %1954 = vmatpush2.bf16.msra.mxu0 0
        %1955 = vmatprep.subr.bf16.mxu0 0
        %1956 = vmatpush2.bf16.msra.mxu0 0
        %1957 = vmatprep.subr.bf16.mxu0 0
        %1958 = vmatpush2.bf16.msra.mxu0 0
        %1959 = vmatprep.subr.bf16.mxu0 0
        %1960 = vmatpush2.bf16.msra.mxu0 0
        %1961 = vmatprep.subr.bf16.mxu0 0
        %1962 = vmatpush2.bf16.msra.mxu0 0
        %1963 = vmatprep.mubr.bf16.mxu0 0
        %1964 = vmatmul.mubr.bf16.gmra.mxu0 %v1908
        %v1965 = vpop.f32.mrf.mxu0
        %v1966 = vadd.f32 %v1906, %v1965
        %v1967 = vpop.f32.mrf.mxu0
        %v1968 = vpop.f32.mrf.mxu0
        %v1969 = vadd.f32 %v1906, %v1968
        %v1970 = vpop.f32.mrf.mxu0
        %1971 = vmatprep.mubr.bf16.mxu0 0
        %1972 = vmatmul.mubr.bf16.gmra.mxu0 %v1911
        %v1973 = vpop.f32.mrf.mxu0
        %v1974 = vadd.f32 %v1906, %v1973
        %v1975 = vpop.f32.mrf.mxu0
        %v1976 = vpop.f32.mrf.mxu0
        %v1977 = vadd.f32 %v1906, %v1976
        %v1978 = vpop.f32.mrf.mxu0
        %1979 = vmatprep.mubr.bf16.mxu0 0
        %1980 = vmatmul.mubr.bf16.gmra.mxu0 %v1914
        %v1981 = vpop.f32.mrf.mxu0
        %v1982 = vadd.f32 %v1906, %v1981
        %v1983 = vpop.f32.mrf.mxu0
        %v1984 = vpop.f32.mrf.mxu0
        %v1985 = vadd.f32 %v1906, %v1984
        %v1986 = vpop.f32.mrf.mxu0
        %1987 = vmatprep.mubr.bf16.mxu0 0
        %1988 = vmatmul.mubr.bf16.gmra.mxu0 %v1917
        %v1989 = vpop.f32.mrf.mxu0
        %v1990 = vadd.f32 %v1906, %v1989
        %v1991 = vpop.f32.mrf.mxu0
        %v1992 = vpop.f32.mrf.mxu0
        %v1993 = vadd.f32 %v1906, %v1992
        %v1994 = vpop.f32.mrf.mxu0
        %1995 = vmatprep.mubr.bf16.mxu0 0
        %1996 = vmatmul.mubr.bf16.gmra.mxu0 %v1920
        %v1997 = vpop.f32.mrf.mxu0
        %v1998 = vadd.f32 %v1906, %v1997
        %v1999 = vpop.f32.mrf.mxu0
        %v2000 = vpop.f32.mrf.mxu0
        %v2001 = vadd.f32 %v1906, %v2000
        %v2002 = vpop.f32.mrf.mxu0
        %2003 = vmatprep.mubr.bf16.mxu0 0
        %2004 = vmatmul.mubr.bf16.gmra.mxu0 %v1923
        %v2005 = vpop.f32.mrf.mxu0
        %v2006 = vadd.f32 %v1906, %v2005
        %v2007 = vpop.f32.mrf.mxu0
        %v2008 = vpop.f32.mrf.mxu0
        %v2009 = vadd.f32 %v1906, %v2008
        %v2010 = vpop.f32.mrf.mxu0
        %2011 = vmatprep.mubr.bf16.mxu0 0
        %2012 = vmatmul.mubr.bf16.gmra.mxu0 %v1926
        %v2013 = vpop.f32.mrf.mxu0
        %v2014 = vadd.f32 %v1906, %v2013
        %v2015 = vpop.f32.mrf.mxu0
        %v2016 = vpop.f32.mrf.mxu0
        %v2017 = vadd.f32 %v1906, %v2016
        %v2018 = vpop.f32.mrf.mxu0
        %2019 = vmatprep.mubr.bf16.mxu0 0
        %2020 = vmatmul.mubr.bf16.gmra.mxu0 %v1929
        %v2021 = vpop.f32.mrf.mxu0
        %v2022 = vadd.f32 %v1906, %v2021
        %v2023 = vpop.f32.mrf.mxu0
        %v2024 = vpop.f32.mrf.mxu0
        %v2025 = vadd.f32 %v1906, %v2024
        %v2026 = vpop.f32.mrf.mxu0
        %2027 = vdwg.mxu0
        %2028 = vmax.xlane.f32.xlu0 %v1966
        %v2029 = vpop.xlane.xlu0 %2028
        %2030 = vmax.xlane.f32.xlu0 %v1969
        %v2031 = vpop.xlane.xlu0 %2030
        %2032 = vmax.xlane.f32.xlu0 %v1974
        %v2033 = vpop.xlane.xlu0 %2032
        %2034 = vmax.xlane.f32.xlu0 %v1977
        %v2035 = vpop.xlane.xlu0 %2034
        %2036 = vmax.xlane.f32.xlu0 %v1982
        %v2037 = vpop.xlane.xlu0 %2036
        %2038 = vmax.xlane.f32.xlu0 %v1985
        %v2039 = vpop.xlane.xlu0 %2038
        %2040 = vmax.xlane.f32.xlu0 %v1990
        %v2041 = vpop.xlane.xlu0 %2040
        %2042 = vmax.xlane.f32.xlu0 %v1993
        %v2043 = vpop.xlane.xlu0 %2042
        %2044 = vmax.xlane.f32.xlu0 %v1998
        %v2045 = vpop.xlane.xlu0 %2044
        %2046 = vmax.xlane.f32.xlu0 %v2001
        %v2047 = vpop.xlane.xlu0 %2046
        %2048 = vmax.xlane.f32.xlu0 %v2006
        %v2049 = vpop.xlane.xlu0 %2048
        %2050 = vmax.xlane.f32.xlu0 %v2009
        %v2051 = vpop.xlane.xlu0 %2050
        %2052 = vmax.xlane.f32.xlu0 %v2014
        %v2053 = vpop.xlane.xlu0 %2052
        %2054 = vmax.xlane.f32.xlu0 %v2017
        %v2055 = vpop.xlane.xlu0 %2054
        %2056 = vmax.xlane.f32.xlu0 %v2022
        %v2057 = vpop.xlane.xlu0 %2056
        %2058 = vmax.xlane.f32.xlu0 %v2025
        %v2059 = vpop.xlane.xlu0 %2058
        %v2060 = vsub.f32 %v1966, %v2029
        %v2061 = vsub.f32 %v1969, %v2031
        %v2062 = vsub.f32 %v1974, %v2033
        %v2063 = vsub.f32 %v1977, %v2035
        %v2064 = vsub.f32 %v1982, %v2037
        %v2065 = vsub.f32 %v1985, %v2039
        %v2066 = vsub.f32 %v1990, %v2041
        %v2067 = vsub.f32 %v1993, %v2043
        %v2068 = vsub.f32 %v1998, %v2045
        %v2069 = vsub.f32 %v2001, %v2047
        %v2070 = vsub.f32 %v2006, %v2049
        %v2071 = vsub.f32 %v2009, %v2051
        %v2072 = vsub.f32 %v2014, %v2053
        %v2073 = vsub.f32 %v2017, %v2055
        %v2074 = vsub.f32 %v2022, %v2057
        %v2075 = vsub.f32 %v2025, %v2059
        %v2076 = vmul.f32 %v2060, 1.442695
        %v2077 = vpow.pop %v2076
        %v2078 = vmul.f32 %v2061, 1.442695
        %v2079 = vpow.pop %v2078
        %v2080 = vmul.f32 %v2062, 1.442695
        %v2081 = vpow.pop %v2080
        %v2082 = vmul.f32 %v2063, 1.442695
        %v2083 = vpow.pop %v2082
        %v2084 = vmul.f32 %v2064, 1.442695
        %v2085 = vpow.pop %v2084
        %v2086 = vmul.f32 %v2065, 1.442695
        %v2087 = vpow.pop %v2086
        %v2088 = vmul.f32 %v2066, 1.442695
        %v2089 = vpow.pop %v2088
        %v2090 = vmul.f32 %v2067, 1.442695
        %v2091 = vpow.pop %v2090
        %v2092 = vmul.f32 %v2068, 1.442695
        %v2093 = vpow.pop %v2092
        %v2094 = vmul.f32 %v2069, 1.442695
        %v2095 = vpow.pop %v2094
        %v2096 = vmul.f32 %v2070, 1.442695
        %v2097 = vpow.pop %v2096
        %v2098 = vmul.f32 %v2071, 1.442695
        %v2099 = vpow.pop %v2098
        %v2100 = vmul.f32 %v2072, 1.442695
        %v2101 = vpow.pop %v2100
        %v2102 = vmul.f32 %v2073, 1.442695
        %v2103 = vpow.pop %v2102
        %v2104 = vmul.f32 %v2074, 1.442695
        %v2105 = vpow.pop %v2104
        %v2106 = vmul.f32 %v2075, 1.442695
        %v2107 = vpow.pop %v2106
        %2108 = vadd.xlane.f32.xlu0 %v2077
        %v2109 = vpop.xlane.xlu0 %2108
        %2110 = vadd.xlane.f32.xlu0 %v2079
        %v2111 = vpop.xlane.xlu0 %2110
        %2112 = vadd.xlane.f32.xlu0 %v2081
        %v2113 = vpop.xlane.xlu0 %2112
        %2114 = vadd.xlane.f32.xlu0 %v2083
        %v2115 = vpop.xlane.xlu0 %2114
        %2116 = vadd.xlane.f32.xlu0 %v2085
        %v2117 = vpop.xlane.xlu0 %2116
        %2118 = vadd.xlane.f32.xlu0 %v2087
        %v2119 = vpop.xlane.xlu0 %2118
        %2120 = vadd.xlane.f32.xlu0 %v2089
        %v2121 = vpop.xlane.xlu0 %2120
        %2122 = vadd.xlane.f32.xlu0 %v2091
        %v2123 = vpop.xlane.xlu0 %2122
        %2124 = vadd.xlane.f32.xlu0 %v2093
        %v2125 = vpop.xlane.xlu0 %2124
        %2126 = vadd.xlane.f32.xlu0 %v2095
        %v2127 = vpop.xlane.xlu0 %2126
        %2128 = vadd.xlane.f32.xlu0 %v2097
        %v2129 = vpop.xlane.xlu0 %2128
        %2130 = vadd.xlane.f32.xlu0 %v2099
        %v2131 = vpop.xlane.xlu0 %2130
        %2132 = vadd.xlane.f32.xlu0 %v2101
        %v2133 = vpop.xlane.xlu0 %2132
        %2134 = vadd.xlane.f32.xlu0 %v2103
        %v2135 = vpop.xlane.xlu0 %2134
        %2136 = vadd.xlane.f32.xlu0 %v2105
        %v2137 = vpop.xlane.xlu0 %2136
        %2138 = vadd.xlane.f32.xlu0 %v2107
        %v2139 = vpop.xlane.xlu0 %2138
        %v2140 = vlog2.pop %v2109
        %v2141 = vmul.f32 %v2140, 0.6931472
        %v2142 = vlog2.pop %v2111
        %v2143 = vmul.f32 %v2142, 0.6931472
        %v2144 = vlog2.pop %v2113
        %v2145 = vmul.f32 %v2144, 0.6931472
        %v2146 = vlog2.pop %v2115
        %v2147 = vmul.f32 %v2146, 0.6931472
        %v2148 = vlog2.pop %v2117
        %v2149 = vmul.f32 %v2148, 0.6931472
        %v2150 = vlog2.pop %v2119
        %v2151 = vmul.f32 %v2150, 0.6931472
        %v2152 = vlog2.pop %v2121
        %v2153 = vmul.f32 %v2152, 0.6931472
        %v2154 = vlog2.pop %v2123
        %v2155 = vmul.f32 %v2154, 0.6931472
        %v2156 = vlog2.pop %v2125
        %v2157 = vmul.f32 %v2156, 0.6931472
        %v2158 = vlog2.pop %v2127
        %v2159 = vmul.f32 %v2158, 0.6931472
        %v2160 = vlog2.pop %v2129
        %v2161 = vmul.f32 %v2160, 0.6931472
        %v2162 = vlog2.pop %v2131
        %v2163 = vmul.f32 %v2162, 0.6931472
        %v2164 = vlog2.pop %v2133
        %v2165 = vmul.f32 %v2164, 0.6931472
        %v2166 = vlog2.pop %v2135
        %v2167 = vmul.f32 %v2166, 0.6931472
        %v2168 = vlog2.pop %v2137
        %v2169 = vmul.f32 %v2168, 0.6931472
        %v2170 = vlog2.pop %v2139
        %v2171 = vmul.f32 %v2170, 0.6931472
        %v2172 = vsub.f32 %v2060, %v2141
        %v2173 = vsub.f32 %v2061, %v2143
        %v2174 = vsub.f32 %v2062, %v2145
        %v2175 = vsub.f32 %v2063, %v2147
        %v2176 = vsub.f32 %v2064, %v2149
        %v2177 = vsub.f32 %v2065, %v2151
        %v2178 = vsub.f32 %v2066, %v2153
        %v2179 = vsub.f32 %v2067, %v2155
        %v2180 = vsub.f32 %v2068, %v2157
        %v2181 = vsub.f32 %v2069, %v2159
        %v2182 = vsub.f32 %v2070, %v2161
        %v2183 = vsub.f32 %v2071, %v2163
        %v2184 = vsub.f32 %v2072, %v2165
        %v2185 = vsub.f32 %v2073, %v2167
        %v2186 = vsub.f32 %v2074, %v2169
        %v2187 = vsub.f32 %v2075, %v2171
        %2188 = vst [vmem:[%s208] sm:$0xff] %v2172
        %2189 = vst [vmem:[%s208 + $0x8] sm:$0xff] %v2173
        %2190 = vst [vmem:[%s208 + $0x10] sm:$0xff] %v2174
        %2191 = vst [vmem:[%s208 + $0x18] sm:$0xff] %v2175
        %2192 = vst [vmem:[%s208 + $0x20] sm:$0xff] %v2176
        %2193 = vst [vmem:[%s208 + $0x28] sm:$0xff] %v2177
        %2194 = vst [vmem:[%s208 + $0x30] sm:$0xff] %v2178
        %2195 = vst [vmem:[%s208 + $0x38] sm:$0xff] %v2179
        %2196 = vst [vmem:[%s208 + $0x40] sm:$0xff] %v2180
        %2197 = vst [vmem:[%s208 + $0x48] sm:$0xff] %v2181
        %2198 = vst [vmem:[%s208 + $0x50] sm:$0xff] %v2182
        %2199 = vst [vmem:[%s208 + $0x58] sm:$0xff] %v2183
        %2200 = vst [vmem:[%s208 + $0x60] sm:$0xff] %v2184
        %2201 = vst [vmem:[%s208 + $0x68] sm:$0xff] %v2185
        %2202 = vst [vmem:[%s208 + $0x70] sm:$0xff] %v2186
        %2203 = vst [vmem:[%s208 + $0x78] sm:$0xff] %v2187
        %s2204 = sand.u32 %s103, 1
        %s2205 = scalar_lea.sflag [#allocation4], %s2204
        %s2206 = sand.u32 %s103, 1
        %s2207 = smul.addr %s2206, 128
        %s2208 = scalar_lea.vmem [#allocation5], %s2207
        // Predicated region
        $region37: #{tpu_custom_call.1} parent=31 // pred_check
          %p2209 = pneg %p113
        $region38: #{tpu_custom_call.1} parent=31 // pred_check_branch
          %2211 = sbr.rel (%p2209) target = $region40
        $region39: #{tpu_custom_call.1} parent=31 // pred_region
          %s2212 = smul.u32 16, %s20
          %s2214 = ssub.s32 2048, 2048
          %2215 = vsyncadd %s2205, %s2214
          %s2216 = smul.addr %s2212, 128
          %s2217 = scalar_lea.hbm %s3, %s2216
          %s2218 = sshll.u32 %s2208, 4
          %s2219 = int_to_ptr.vmem [resolvable:$true] %s2218
          %2224 = dma.vmem_to_hbm [thread:$0]  %s2219, 2048, %s2217, %s2205, 128, 128, 8
        $region40: #{tpu_custom_call.1} parent=31 // pred_fallthru
          _
      $region32: #{tpu_custom_call.1} parent=5 // pred_fallthru
        _
      %p2225 = scmp.le.s32.totalorder 2, %s15
      // Predicated region
      $region41: #{tpu_custom_call.1} parent=5 // pred_check
        %p2226 = pneg %p2225
      $region42: #{tpu_custom_call.1} parent=5 // pred_check_branch
        %2228 = sbr.rel (%p2226) target = $region44
      $region43: #{tpu_custom_call.1} parent=5 // pred_region
        %s2229 = ssub.s32 %s15, 2
        // Predicated region
        $region45: #{tpu_custom_call.1} parent=43 // pred_check
          %p2230 = pneg %p119
        $region46: #{tpu_custom_call.1} parent=43 // pred_check_branch
          %2232 = sbr.rel (%p2230) target = $region48
        $region47: #{tpu_custom_call.1} parent=43 // pred_region
          %s2233 = sand.u32 %s104, 1
          %s2234 = scalar_lea.sflag [#allocation4], %s2233
          %s2235 = sand.u32 %s104, 1
          %s2236 = smul.addr %s2235, 128
          %s2237 = scalar_lea.vmem [#allocation5], %s2236
          %2238 = dma.done %s2234, 2048
        $region48: #{tpu_custom_call.1} parent=43 // pred_fallthru
          _
      $region44: #{tpu_custom_call.1} parent=5 // pred_fallthru
        _
    $region6: #{tpu_custom_call.1} parent=1 // loop_footer
      %s19 = sadd.s32 1, %s15
    $region7: #{tpu_custom_call.1} parent=1 // loop_footer_branch
      %14 = sbr.rel target = $region3
    $region8: #{tpu_custom_call.1} parent=1 // loop_exit
      _
    %2239 = vsyncpa [#allocation3], 1
    %s2240 = scalar_lea.sflag [#allocation3], 1
    %2241 = vsyncpa %s2240, 1
    %2242 = vsyncpa [#allocation4], 1
    %s2243 = scalar_lea.sflag [#allocation4], 1
    %2244 = vsyncpa %s2243, 1

</llo_original>
